<compile_context>
chip_gen: v6e
topology: v6e:2x2x1
jax: 0.10.0
libtpu: 0.0.40
codegen_flags: <defaults>
</compile_context>

<pallas_src>
import jax
import jax.numpy as jnp
from jax.experimental import pallas as pl
from jax.experimental.pallas import tpu as pltpu


def item_model_kernel(pe_ref, mask_row_ref, mask_col_ref, qi_ref,
                      g_w1_ref, g_b1_ref, g_w2_ref, g_b2_ref,
                      a_w1f_ref, a_w1q_ref, a_b1_ref, a_w2_ref, a_b2_ref,
                      ag_w_ref, ag_b_ref,
                      out_ref):
    # a_w1f_ref / a_b1_ref hold the *fused* attention f-projection:
    #   a_w1f_fused = g_w2 @ a_w1f ,  a_b1_fused = g_b2 @ a_w1f + a_b1
    Bt, U, D2 = pe_ref.shape
    D = D2 // 2
    eps = 1e-10

    # ---- shared hidden: h = relu([p_t ; e_r] @ g_w1 + g_b1) -----------------
    pe = pe_ref[...].reshape(Bt * U, D2)                    # rows of [p_t ; e_r]
    h = jnp.dot(pe, g_w1_ref[...], preferred_element_type=jnp.float32) + g_b1_ref[...]
    h = jnp.maximum(h, 0.0)                                 # (Bt*U, D)

    # ---- f_jt and attention f-projection (independent matmuls on h) ---------
    f2 = jnp.dot(h, g_w2_ref[...], preferred_element_type=jnp.float32) + g_b2_ref[...]
    f3 = f2.reshape(Bt, U, D)                               # f_jt
    ahf = jnp.dot(h, a_w1f_ref[...],                        # == f2 @ a_w1f (fused)
                  preferred_element_type=jnp.float32).reshape(Bt, U, D)

    # ---- attention hidden: relu(f @ Wf + (mask*q_item) @ Wq + b1) -----------
    # (mask * q) @ Wq == mask * (q @ Wq): one (Bt,D)x(D,D) matmul per tile.
    qh = jnp.dot(qi_ref[...], a_w1q_ref[...], preferred_element_type=jnp.float32)   # (Bt, D)
    ah = ahf + mask_col_ref[...] * qh[:, None, :] + a_b1_ref[...]
    ah = jnp.maximum(ah, 0.0)                               # (Bt, U, D)

    # ---- attention logits, lane-dense (users on the lane axis) --------------
    # a_w2 is stored as a (1, D) row; 'brd,bud->bru' contracts D and lands U on
    # lanes, so the softmax below is lane-dense instead of a (.,1) column path.
    w2_row = jnp.broadcast_to(a_w2_ref[...][None], (Bt, 1, D))
    mu = jnp.einsum('brd,bud->bru', w2_row, ah,
                    preferred_element_type=jnp.float32) + a_b2_ref[...]   # (Bt, 1, U)

    # ---- masked softmax over the user (lane) axis ----------------------------
    w = jnp.exp(mu) * mask_row_ref[...]                     # (Bt, 1, U)
    denom = jnp.sum(w, axis=-1, keepdims=True) + eps        # (Bt, 1, 1)
    w = w * pl.reciprocal(denom, approx=True)

    # ---- weighted sum over users (batched MXU matmul) + Aggregator ----------
    s = jnp.einsum('bru,bud->brd', w, f3,
                   preferred_element_type=jnp.float32).reshape(Bt, D)     # (Bt, D)
    z = jnp.dot(s, ag_w_ref[...], preferred_element_type=jnp.float32) + ag_b_ref[...]
    out_ref[...] = jnp.maximum(z, 0.0)


def _pick_block_b(B, requested):
    """Largest batch tile <= requested that divides B and keeps (8,128) legality."""
    requested = max(1, min(requested, B))
    if B % requested == 0 and (requested % 8 == 0 or requested == B):
        return requested
    for b in range(min(requested, B), 0, -1):
        if B % b == 0 and b % 8 == 0:
            return b
    return B


def item_model_forward(p_t, i_user_er, mask, q_item, params, *, block_b=8):
    B, U, D = p_t.shape
    block_b = _pick_block_b(B, block_b)

    # Plain-JAX layout glue (free, outside the kernel):
    pe = jnp.concatenate([p_t, i_user_er], axis=-1)         # (B, U, 2D)
    mask_row = mask.reshape(B, 1, U)                        # lane-dense (softmax)
    mask_col = mask.reshape(B, U, 1)                        # column form (q-path broadcast)

    # Fused attention f-projection (constant-size, computed once on weights):
    #   (h @ g_w2 + g_b2) @ a_w1f == h @ (g_w2 @ a_w1f) + g_b2 @ a_w1f
    a_w1f_fused = params['g_w2'] @ params['a_w1f']                          # (D, D)
    a_b1_fused = params['g_b2'] @ params['a_w1f'] + params['a_b1']          # (1, D)

    weights = (params['g_w1'], params['g_b1'], params['g_w2'], params['g_b2'],
               a_w1f_fused, params['a_w1q'], a_b1_fused,
               params['a_w2'], params['a_b2'],
               params['ag_w'], params['ag_b'])
    inputs = (pe, mask_row, mask_col, q_item) + weights

    in_specs = [
        pl.BlockSpec((block_b, U, 2 * D), lambda i: (i, 0, 0)),   # [p ; e_r]
        pl.BlockSpec((block_b, 1, U),     lambda i: (i, 0, 0)),   # mask (lane-dense)
        pl.BlockSpec((block_b, U, 1),     lambda i: (i, 0, 0)),   # mask (column)
        pl.BlockSpec((block_b, D),        lambda i: (i, 0)),      # q_item
    ] + [
        # Weights: full blocks, constant index map -> stay VMEM-resident.
        pl.BlockSpec(w.shape, lambda i: (0, 0)) for w in weights
    ]

    flops = int(
        2 * B * U * (2 * D) * D      # g_u layer 1 (fused concat matmul)
        + 2 * B * U * D * D          # g_u layer 2
        + 2 * B * U * D * D          # attention f-projection (fused onto h)
        + 2 * B * D * D              # qh = q_item @ a_w1q
        + 2 * B * U * D              # attention logits
        + 2 * B * U * D              # softmax-weighted sum
        + 2 * B * D * D              # aggregator
    )
    bytes_accessed = int(sum(a.size * a.dtype.itemsize for a in inputs) + B * D * 4)
    cost = pl.CostEstimate(flops=flops,
                           transcendentals=int(B * U + B),
                           bytes_accessed=bytes_accessed)

    return pl.pallas_call(
        item_model_kernel,
        out_shape=jax.ShapeDtypeStruct((B, D), jnp.float32),
        grid=(B // block_b,),
        in_specs=in_specs,
        out_specs=pl.BlockSpec((block_b, D), lambda i: (i, 0)),
        compiler_params=pltpu.CompilerParams(
            dimension_semantics=("parallel",),          # batch tiles -> both TCs on v7x
            vmem_limit_bytes=32 * 1024 * 1024),         # size block_b so live tiles fit
        cost_estimate=cost,
    )(*inputs)


def reference_forward(p_t, i_user_er, mask, q_item, params):
    """Pure-JAX reference mirroring the PyTorch module exactly."""
    B, U, D = p_t.shape
    x = jnp.concatenate([p_t, i_user_er], axis=2).reshape(-1, 2 * D)
    h = jnp.maximum(x @ params['g_w1'] + params['g_b1'], 0.0)
    f = (h @ params['g_w2'] + params['g_b2']).reshape(B, U, D)
    q = mask[:, :, None] * q_item[:, None, :]
    x2 = jnp.concatenate([f, q], axis=2).reshape(-1, 2 * D)
    w1a = jnp.concatenate([params['a_w1f'], params['a_w1q']], axis=0)
    ah = jnp.maximum(x2 @ w1a + params['a_b1'], 0.0)
    mu = (ah @ params['a_w2'].T + params['a_b2']).reshape(B, U)
    mu = jnp.exp(mu) * mask
    mu = mu / (jnp.sum(mu, axis=1, keepdims=True) + 1e-10)
    s = jnp.sum(mu[:, :, None] * f, axis=1)
    return jnp.maximum(s @ params['ag_w'] + params['ag_b'], 0.0)


if __name__ == "__main__":
    # Small, deterministic problem sizes (B chosen so grid=(2,) exercises tiling).
    B, U, D = 16, 8, 32          # batch of items, padded users per item, emb_dim
    n_users, n_items, n_ratings = 50, 20, 6

    key = jax.random.PRNGKey(0)
    keys = jax.random.split(key, 20)

    # Embedding tables (deterministic synthetic weights).
    user_tab = jax.random.normal(keys[0], (n_users, D), jnp.float32) * 0.1
    item_tab = jax.random.normal(keys[1], (n_items, D), jnp.float32) * 0.1
    rating_tab = jax.random.normal(keys[2], (n_ratings, D), jnp.float32) * 0.1

    # MLP / Aggregator parameters, stored as [in_dim, out_dim]; the attention
    # output projection a_w2 is stored as a (1, D) row.
    params = {
        # g_u : Linear(2D -> D), ReLU, Linear(D -> D)
        'g_w1':  jax.random.normal(keys[3], (2 * D, D), jnp.float32) * 0.1,
        'g_b1':  jax.random.normal(keys[4], (1, D), jnp.float32) * 0.1,
        'g_w2':  jax.random.normal(keys[5], (D, D), jnp.float32) * 0.1,
        'g_b2':  jax.random.normal(keys[6], (1, D), jnp.float32) * 0.1,
        # item_users_attn : Linear(2D -> D) split into f-half / q-half, ReLU, Linear(D -> 1)
        'a_w1f': jax.random.normal(keys[7], (D, D), jnp.float32) * 0.1,
        'a_w1q': jax.random.normal(keys[8], (D, D), jnp.float32) * 0.1,
        'a_b1':  jax.random.normal(keys[9], (1, D), jnp.float32) * 0.1,
        'a_w2':  jax.random.normal(keys[10], (1, D), jnp.float32) * 0.1,
        'a_b2':  jax.random.normal(keys[11], (1, 1), jnp.float32) * 0.1,
        # aggr_users : Linear(D -> D) + ReLU
        'ag_w':  jax.random.normal(keys[12], (D, D), jnp.float32) * 0.1,
        'ag_b':  jax.random.normal(keys[13], (1, D), jnp.float32) * 0.1,
    }

    # Inputs: item ids and padded (user_id, rating_id) pairs per item.
    iids = jax.random.randint(keys[14], (B,), 0, n_items)
    uid_pad = jax.random.randint(keys[15], (B, U), 0, n_users)   # 0 => padding
    rid_pad = jax.random.randint(keys[16], (B, U), 0, n_ratings)
    i_user_pad = jnp.stack([uid_pad, rid_pad], axis=2)           # (B, U, 2)

    # Plain-JAX glue: embedding gathers + mask.
    p_t = user_tab[i_user_pad[:, :, 0]]                          # (B, U, D)
    i_user_er = rating_tab[i_user_pad[:, :, 1]]                  # (B, U, D)
    mask = jnp.where(i_user_pad[:, :, 0] > 0, 1.0, 0.0).astype(jnp.float32)  # (B, U)
    q_item = item_tab[iids]                                      # (B, D)

    z = item_model_forward(p_t, i_user_er, mask, q_item, params, block_b=8)
    z = jax.block_until_ready(z)

    z_ref = reference_forward(p_t, i_user_er, mask, q_item, params)
    assert z.shape == (B, D)
    # Tolerance is 1e-3: the softmax denominator uses the EUP approximate
    # reciprocal and the attention f-projection is re-associated onto h.
    assert jnp.allclose(z, z_ref, atol=1e-3, rtol=1e-3), "Pallas kernel mismatch vs JAX reference"

    print("KERNEL_OK")
</pallas_src>

<mosaic_0001>
module attributes {stable_mosaic.version = 11 : i64} {
  func.func @item_model_kernel(%arg0: i32, %arg1: memref<8x8x64xf32, #tpu.memory_space<vmem>>, %arg2: memref<8x1x8xf32, #tpu.memory_space<vmem>>, %arg3: memref<8x8x1xf32, #tpu.memory_space<vmem>>, %arg4: memref<8x32xf32, #tpu.memory_space<vmem>>, %arg5: memref<64x32xf32, #tpu.memory_space<vmem>>, %arg6: memref<1x32xf32, #tpu.memory_space<vmem>>, %arg7: memref<32x32xf32, #tpu.memory_space<vmem>>, %arg8: memref<1x32xf32, #tpu.memory_space<vmem>>, %arg9: memref<32x32xf32, #tpu.memory_space<vmem>>, %arg10: memref<32x32xf32, #tpu.memory_space<vmem>>, %arg11: memref<1x32xf32, #tpu.memory_space<vmem>>, %arg12: memref<1x32xf32, #tpu.memory_space<vmem>>, %arg13: memref<1x1xf32, #tpu.memory_space<vmem>>, %arg14: memref<32x32xf32, #tpu.memory_space<vmem>>, %arg15: memref<1x32xf32, #tpu.memory_space<vmem>>, %arg16: memref<8x32xf32, #tpu.memory_space<vmem>>) attributes {dimension_semantics = [#tpu.dimension_semantics<parallel>], iteration_bounds = array<i64: 2>, scalar_prefetch = 0 : i64, scratch_operands = 0 : i64, tpu.core_type = #tpu.core_type<tc>, window_params = [{transform_indices = @transform_0, window_bounds = array<i64: 8, 8, 64>}, {transform_indices = @transform_1, window_bounds = array<i64: 8, 1, 8>}, {transform_indices = @transform_2, window_bounds = array<i64: 8, 8, 1>}, {transform_indices = @transform_3, window_bounds = array<i64: 8, 32>}, {pipeline_mode = #tpu.pipeline_mode<synchronous>, transform_indices = @transform_4, window_bounds = array<i64: 64, 32>}, {pipeline_mode = #tpu.pipeline_mode<synchronous>, transform_indices = @transform_5, window_bounds = array<i64: 1, 32>}, {pipeline_mode = #tpu.pipeline_mode<synchronous>, transform_indices = @transform_6, window_bounds = array<i64: 32, 32>}, {pipeline_mode = #tpu.pipeline_mode<synchronous>, transform_indices = @transform_7, window_bounds = array<i64: 1, 32>}, {pipeline_mode = #tpu.pipeline_mode<synchronous>, transform_indices = @transform_8, window_bounds = array<i64: 32, 32>}, {pipeline_mode = #tpu.pipeline_mode<synchronous>, transform_indices = @transform_9, window_bounds = array<i64: 32, 32>}, {pipeline_mode = #tpu.pipeline_mode<synchronous>, transform_indices = @transform_10, window_bounds = array<i64: 1, 32>}, {pipeline_mode = #tpu.pipeline_mode<synchronous>, transform_indices = @transform_11, window_bounds = array<i64: 1, 32>}, {pipeline_mode = #tpu.pipeline_mode<synchronous>, transform_indices = @transform_12, window_bounds = array<i64: 1, 1>}, {pipeline_mode = #tpu.pipeline_mode<synchronous>, transform_indices = @transform_13, window_bounds = array<i64: 32, 32>}, {pipeline_mode = #tpu.pipeline_mode<synchronous>, transform_indices = @transform_14, window_bounds = array<i64: 1, 32>}, {transform_indices = @transform_15, window_bounds = array<i64: 8, 32>}]} {
    %c0 = arith.constant 0 : index
    %c0_0 = arith.constant 0 : index
    %c0_1 = arith.constant 0 : index
    %0 = vector.load %arg1[%c0, %c0_0, %c0_1] : memref<8x8x64xf32, #tpu.memory_space<vmem>>, vector<8x8x64xf32>
    %1 = vector.shape_cast %0 : vector<8x8x64xf32> to vector<64x64xf32>
    %c0_2 = arith.constant 0 : index
    %c0_3 = arith.constant 0 : index
    %2 = vector.load %arg5[%c0_2, %c0_3] : memref<64x32xf32, #tpu.memory_space<vmem>>, vector<64x32xf32>
    %cst = arith.constant dense<0.000000e+00> : vector<64x32xf32>
    %3 = tpu.matmul %1, %2, %cst {dimension_numbers = #tpu.dot_dimension_numbers<[1], [0], [0], [1], [0, 0, 1, 1], [], []>} : vector<64x64xf32>, vector<64x32xf32>, vector<64x32xf32> -> vector<64x32xf32>
    %c0_4 = arith.constant 0 : index
    %c0_5 = arith.constant 0 : index
    %4 = vector.load %arg6[%c0_4, %c0_5] : memref<1x32xf32, #tpu.memory_space<vmem>>, vector<1x32xf32>
    %5 = vector.broadcast %4 : vector<1x32xf32> to vector<64x32xf32>
    %6 = arith.addf %3, %5 : vector<64x32xf32>
    %cst_6 = arith.constant 0.000000e+00 : f32
    %7 = vector.broadcast %cst_6 : f32 to vector<64x32xf32>
    %8 = arith.maximumf %6, %7 : vector<64x32xf32>
    %c0_7 = arith.constant 0 : index
    %c0_8 = arith.constant 0 : index
    %9 = vector.load %arg7[%c0_7, %c0_8] : memref<32x32xf32, #tpu.memory_space<vmem>>, vector<32x32xf32>
    %cst_9 = arith.constant dense<0.000000e+00> : vector<64x32xf32>
    %10 = tpu.matmul %8, %9, %cst_9 {dimension_numbers = #tpu.dot_dimension_numbers<[1], [0], [0], [1], [0, 0, 1, 1], [], []>} : vector<64x32xf32>, vector<32x32xf32>, vector<64x32xf32> -> vector<64x32xf32>
    %c0_10 = arith.constant 0 : index
    %c0_11 = arith.constant 0 : index
    %11 = vector.load %arg8[%c0_10, %c0_11] : memref<1x32xf32, #tpu.memory_space<vmem>>, vector<1x32xf32>
    %12 = vector.broadcast %11 : vector<1x32xf32> to vector<64x32xf32>
    %13 = arith.addf %10, %12 : vector<64x32xf32>
    %14 = vector.shape_cast %13 : vector<64x32xf32> to vector<8x8x32xf32>
    %c0_12 = arith.constant 0 : index
    %c0_13 = arith.constant 0 : index
    %15 = vector.load %arg9[%c0_12, %c0_13] : memref<32x32xf32, #tpu.memory_space<vmem>>, vector<32x32xf32>
    %cst_14 = arith.constant dense<0.000000e+00> : vector<64x32xf32>
    %16 = tpu.matmul %8, %15, %cst_14 {dimension_numbers = #tpu.dot_dimension_numbers<[1], [0], [0], [1], [0, 0, 1, 1], [], []>} : vector<64x32xf32>, vector<32x32xf32>, vector<64x32xf32> -> vector<64x32xf32>
    %17 = vector.shape_cast %16 : vector<64x32xf32> to vector<8x8x32xf32>
    %c0_15 = arith.constant 0 : index
    %c0_16 = arith.constant 0 : index
    %18 = vector.load %arg4[%c0_15, %c0_16] : memref<8x32xf32, #tpu.memory_space<vmem>>, vector<8x32xf32>
    %c0_17 = arith.constant 0 : index
    %c0_18 = arith.constant 0 : index
    %19 = vector.load %arg10[%c0_17, %c0_18] : memref<32x32xf32, #tpu.memory_space<vmem>>, vector<32x32xf32>
    %cst_19 = arith.constant dense<0.000000e+00> : vector<8x32xf32>
    %20 = tpu.matmul %18, %19, %cst_19 {dimension_numbers = #tpu.dot_dimension_numbers<[1], [0], [0], [1], [0, 0, 1, 1], [], []>} : vector<8x32xf32>, vector<32x32xf32>, vector<8x32xf32> -> vector<8x32xf32>
    %c0_20 = arith.constant 0 : index
    %c0_21 = arith.constant 0 : index
    %c0_22 = arith.constant 0 : index
    %21 = vector.load %arg3[%c0_20, %c0_21, %c0_22] : memref<8x8x1xf32, #tpu.memory_space<vmem>>, vector<8x8x1xf32>
    %22 = vector.shape_cast %20 : vector<8x32xf32> to vector<8x1x32xf32>
    %23 = vector.broadcast %21 : vector<8x8x1xf32> to vector<8x8x32xf32>
    %24 = vector.broadcast %22 : vector<8x1x32xf32> to vector<8x8x32xf32>
    %25 = arith.mulf %23, %24 : vector<8x8x32xf32>
    %26 = arith.addf %17, %25 : vector<8x8x32xf32>
    %c0_23 = arith.constant 0 : index
    %c0_24 = arith.constant 0 : index
    %27 = vector.load %arg11[%c0_23, %c0_24] : memref<1x32xf32, #tpu.memory_space<vmem>>, vector<1x32xf32>
    %28 = vector.shape_cast %27 : vector<1x32xf32> to vector<1x1x32xf32>
    %29 = vector.broadcast %28 : vector<1x1x32xf32> to vector<8x8x32xf32>
    %30 = arith.addf %26, %29 : vector<8x8x32xf32>
    %cst_25 = arith.constant 0.000000e+00 : f32
    %31 = vector.broadcast %cst_25 : f32 to vector<8x8x32xf32>
    %32 = arith.maximumf %30, %31 : vector<8x8x32xf32>
    %c0_26 = arith.constant 0 : index
    %c0_27 = arith.constant 0 : index
    %33 = vector.load %arg12[%c0_26, %c0_27] : memref<1x32xf32, #tpu.memory_space<vmem>>, vector<1x32xf32>
    %34 = vector.shape_cast %33 : vector<1x32xf32> to vector<1x1x32xf32>
    %35 = vector.shape_cast %34 : vector<1x1x32xf32> to vector<1x1x32xf32>
    %36 = vector.broadcast %35 : vector<1x1x32xf32> to vector<8x1x32xf32>
    "tpu.trace_start"() <{level = 10 : i32, message = "brd,bud->bru"}> : () -> ()
    %cst_28 = arith.constant dense<0.000000e+00> : vector<8x1x8xf32>
    %37 = tpu.matmul %36, %32, %cst_28 {dimension_numbers = #tpu.dot_dimension_numbers<[2], [2], [1], [1], [0, 0, 0, 1, 1, 1], [0], [0]>} : vector<8x1x32xf32>, vector<8x8x32xf32>, vector<8x1x8xf32> -> vector<8x1x8xf32>
    "tpu.trace_stop"() : () -> ()
    %c0_29 = arith.constant 0 : index
    %c0_30 = arith.constant 0 : index
    %38 = vector.load %arg13[%c0_29, %c0_30] : memref<1x1xf32, #tpu.memory_space<vmem>>, vector<1x1xf32>
    %39 = vector.shape_cast %38 : vector<1x1xf32> to vector<1x1x1xf32>
    %40 = vector.broadcast %39 : vector<1x1x1xf32> to vector<8x1x8xf32>
    %41 = arith.addf %37, %40 : vector<8x1x8xf32>
    %42 = math.exp %41 : vector<8x1x8xf32>
    %c0_31 = arith.constant 0 : index
    %c0_32 = arith.constant 0 : index
    %c0_33 = arith.constant 0 : index
    %43 = vector.load %arg2[%c0_31, %c0_32, %c0_33] : memref<8x1x8xf32, #tpu.memory_space<vmem>>, vector<8x1x8xf32>
    %44 = arith.mulf %42, %43 : vector<8x1x8xf32>
    %cst_34 = arith.constant dense<0.000000e+00> : vector<8x1xf32>
    %45 = vector.multi_reduction <add>, %44, %cst_34 [2] : vector<8x1x8xf32> to vector<8x1xf32>
    %46 = vector.shape_cast %45 : vector<8x1xf32> to vector<8x1x1xf32>
    %cst_35 = arith.constant 1.000000e-10 : f32
    %47 = vector.broadcast %cst_35 : f32 to vector<8x1x1xf32>
    %48 = arith.addf %46, %47 : vector<8x1x1xf32>
    %49 = tpu.reciprocal %48 {approx = true} : vector<8x1x1xf32> -> vector<8x1x1xf32>
    %50 = vector.broadcast %49 : vector<8x1x1xf32> to vector<8x1x8xf32>
    %51 = arith.mulf %44, %50 : vector<8x1x8xf32>
    "tpu.trace_start"() <{level = 10 : i32, message = "bru,bud->brd"}> : () -> ()
    %cst_36 = arith.constant dense<0.000000e+00> : vector<8x1x32xf32>
    %52 = tpu.matmul %51, %14, %cst_36 {dimension_numbers = #tpu.dot_dimension_numbers<[2], [1], [1], [2], [0, 0, 0, 1, 1, 2], [0], [0]>} : vector<8x1x8xf32>, vector<8x8x32xf32>, vector<8x1x32xf32> -> vector<8x1x32xf32>
    "tpu.trace_stop"() : () -> ()
    %53 = vector.shape_cast %52 : vector<8x1x32xf32> to vector<8x32xf32>
    %c0_37 = arith.constant 0 : index
    %c0_38 = arith.constant 0 : index
    %54 = vector.load %arg14[%c0_37, %c0_38] : memref<32x32xf32, #tpu.memory_space<vmem>>, vector<32x32xf32>
    %cst_39 = arith.constant dense<0.000000e+00> : vector<8x32xf32>
    %55 = tpu.matmul %53, %54, %cst_39 {dimension_numbers = #tpu.dot_dimension_numbers<[1], [0], [0], [1], [0, 0, 1, 1], [], []>} : vector<8x32xf32>, vector<32x32xf32>, vector<8x32xf32> -> vector<8x32xf32>
    %c0_40 = arith.constant 0 : index
    %c0_41 = arith.constant 0 : index
    %56 = vector.load %arg15[%c0_40, %c0_41] : memref<1x32xf32, #tpu.memory_space<vmem>>, vector<1x32xf32>
    %57 = vector.broadcast %56 : vector<1x32xf32> to vector<8x32xf32>
    %58 = arith.addf %55, %57 : vector<8x32xf32>
    %cst_42 = arith.constant 0.000000e+00 : f32
    %59 = vector.broadcast %cst_42 : f32 to vector<8x32xf32>
    %60 = arith.maximumf %58, %59 : vector<8x32xf32>
    %c0_43 = arith.constant 0 : index
    %c0_44 = arith.constant 0 : index
    %61 = vector.load %arg16[%c0_43, %c0_44] : memref<8x32xf32, #tpu.memory_space<vmem>>, vector<8x32xf32>
    tpu.vector_store %arg16[%c0_43, %c0_44], %60 {strides = array<i32>} : memref<8x32xf32, #tpu.memory_space<vmem>>, vector<8x32xf32>,
    return
  }
  func.func @transform_0(%arg0: i32) -> (i32, i32, i32) {
    %c0_i32 = arith.constant 0 : i32
    %c0_i32_0 = arith.constant 0 : i32
    %c0_i32_1 = arith.constant 0 : i32
    return %arg0, %c0_i32, %c0_i32_0 : i32, i32, i32
  }
  func.func @transform_1(%arg0: i32) -> (i32, i32, i32) {
    %c0_i32 = arith.constant 0 : i32
    %c0_i32_0 = arith.constant 0 : i32
    %c0_i32_1 = arith.constant 0 : i32
    return %arg0, %c0_i32, %c0_i32_0 : i32, i32, i32
  }
  func.func @transform_2(%arg0: i32) -> (i32, i32, i32) {
    %c0_i32 = arith.constant 0 : i32
    %c0_i32_0 = arith.constant 0 : i32
    %c0_i32_1 = arith.constant 0 : i32
    return %arg0, %c0_i32, %c0_i32_0 : i32, i32, i32
  }
  func.func @transform_3(%arg0: i32) -> (i32, i32) {
    %c0_i32 = arith.constant 0 : i32
    %c0_i32_0 = arith.constant 0 : i32
    return %arg0, %c0_i32 : i32, i32
  }
  func.func @transform_4(%arg0: i32) -> (i32, i32) {
    %c0_i32 = arith.constant 0 : i32
    %c0_i32_0 = arith.constant 0 : i32
    %c0_i32_1 = arith.constant 0 : i32
    return %c0_i32, %c0_i32_0 : i32, i32
  }
  func.func @transform_5(%arg0: i32) -> (i32, i32) {
    %c0_i32 = arith.constant 0 : i32
    %c0_i32_0 = arith.constant 0 : i32
    %c0_i32_1 = arith.constant 0 : i32
    return %c0_i32, %c0_i32_0 : i32, i32
  }
  func.func @transform_6(%arg0: i32) -> (i32, i32) {
    %c0_i32 = arith.constant 0 : i32
    %c0_i32_0 = arith.constant 0 : i32
    %c0_i32_1 = arith.constant 0 : i32
    return %c0_i32, %c0_i32_0 : i32, i32
  }
  func.func @transform_7(%arg0: i32) -> (i32, i32) {
    %c0_i32 = arith.constant 0 : i32
    %c0_i32_0 = arith.constant 0 : i32
    %c0_i32_1 = arith.constant 0 : i32
    return %c0_i32, %c0_i32_0 : i32, i32
  }
  func.func @transform_8(%arg0: i32) -> (i32, i32) {
    %c0_i32 = arith.constant 0 : i32
    %c0_i32_0 = arith.constant 0 : i32
    %c0_i32_1 = arith.constant 0 : i32
    return %c0_i32, %c0_i32_0 : i32, i32
  }
  func.func @transform_9(%arg0: i32) -> (i32, i32) {
    %c0_i32 = arith.constant 0 : i32
    %c0_i32_0 = arith.constant 0 : i32
    %c0_i32_1 = arith.constant 0 : i32
    return %c0_i32, %c0_i32_0 : i32, i32
  }
  func.func @transform_10(%arg0: i32) -> (i32, i32) {
    %c0_i32 = arith.constant 0 : i32
    %c0_i32_0 = arith.constant 0 : i32
    %c0_i32_1 = arith.constant 0 : i32
    return %c0_i32, %c0_i32_0 : i32, i32
  }
  func.func @transform_11(%arg0: i32) -> (i32, i32) {
    %c0_i32 = arith.constant 0 : i32
    %c0_i32_0 = arith.constant 0 : i32
    %c0_i32_1 = arith.constant 0 : i32
    return %c0_i32, %c0_i32_0 : i32, i32
  }
  func.func @transform_12(%arg0: i32) -> (i32, i32) {
    %c0_i32 = arith.constant 0 : i32
    %c0_i32_0 = arith.constant 0 : i32
    %c0_i32_1 = arith.constant 0 : i32
    return %c0_i32, %c0_i32_0 : i32, i32
  }
  func.func @transform_13(%arg0: i32) -> (i32, i32) {
    %c0_i32 = arith.constant 0 : i32
    %c0_i32_0 = arith.constant 0 : i32
    %c0_i32_1 = arith.constant 0 : i32
    return %c0_i32, %c0_i32_0 : i32, i32
  }
  func.func @transform_14(%arg0: i32) -> (i32, i32) {
    %c0_i32 = arith.constant 0 : i32
    %c0_i32_0 = arith.constant 0 : i32
    %c0_i32_1 = arith.constant 0 : i32
    return %c0_i32, %c0_i32_0 : i32, i32
  }
  func.func @transform_15(%arg0: i32) -> (i32, i32) {
    %c0_i32 = arith.constant 0 : i32
    %c0_i32_0 = arith.constant 0 : i32
    return %arg0, %c0_i32 : i32, i32
  }
}

</mosaic_0001>

<llo_original>
// kernel: tpu_custom_call.1
$region0: #{tpu_custom_call.1}
  #allocation0 [shape = 'u32[]', space=smem, size = 0x4, offset = 0x4, fixed_abs, tag = 'smem constant byte address 0x4 - core index']
  #allocation1 [shape = 'u32[144,128]{1,0:T(1,128)}', space=vmem, size = 0x12000, scoped, tag = 'internal scratch']
  #allocation2 [shape = 'f32[1,1]{1,0:T(1,128)S(1)}', space=vmem, size = 0x200, scoped, tag = 'scoped memory for tpu_custom_call.1']
  %s0 = inlined_call_operand.vmem [shape: f32[16,8,64], index: 0, kind: input, shape index: {}]
  %s1 = inlined_call_operand.vmem [shape: f32[16,1,8], index: 1, kind: input, shape index: {}]
  %s2 = inlined_call_operand.vmem [shape: f32[16,8,1], index: 2, kind: input, shape index: {}]
  %s3 = inlined_call_operand.hbm [shape: f32[16,32], index: 3, kind: input, shape index: {}]
  %s4 = inlined_call_operand.vmem [shape: f32[64,32], index: 4, kind: input, shape index: {}]
  %s5 = inlined_call_operand.vmem [shape: f32[1,32], index: 5, kind: input, shape index: {}]
  %s6 = inlined_call_operand.vmem [shape: f32[32,32], index: 6, kind: input, shape index: {}]
  %s7 = inlined_call_operand.vmem [shape: f32[1,32], index: 7, kind: input, shape index: {}]
  %s8 = inlined_call_operand.vmem [shape: f32[32,32], index: 8, kind: input, shape index: {}]
  %s9 = inlined_call_operand.vmem [shape: f32[32,32], index: 9, kind: input, shape index: {}]
  %s10 = inlined_call_operand.vmem [shape: f32[1,32], index: 10, kind: input, shape index: {}]
  %s11 = inlined_call_operand.vmem [shape: f32[1,32], index: 11, kind: input, shape index: {}]
  %s12 = inlined_call_operand.<no memory space> [shape: f32[1,1], index: 12, kind: input, shape index: {}]
  %s13 = inlined_call_operand.hbm [shape: f32[32,32], index: 13, kind: input, shape index: {}]
  %s14 = inlined_call_operand.vmem [shape: f32[1,32], index: 14, kind: input, shape index: {}]
  %s15 = inlined_call_operand.hbm [shape: f32[16,32], index: 15, kind: output, shape index: {}]
  %s16 = sld [smem:[#allocation0]]
  $region101: #{tpu_custom_call.1} parent=0
    _
  %s18 = ssub.s32 1, %s16
  %s19 = scalar_select 0, %s18, %s16
  %v20 = vstv %s12
  %21 = vst [vmem:[#allocation2] sm:$0x1] %v20
  $region1: #{tpu_custom_call.1} parent=0
    #allocation3 [shape = 'u8[8192]{0}', space=vmem, size = 0x2000, scoped, tag = 'input window, operand 3']
    #allocation4 [shape = 's32[2]{0}', space=sflag, size = 0x8, scoped, tag = 'scoped memory for tpu_custom_call.1']
    #allocation5 [shape = 's32[2]{0}', space=sflag, size = 0x8, scoped, tag = 'scoped memory for tpu_custom_call.1']
    #allocation6 [shape = 'u8[16384]{0}', space=vmem, size = 0x4000, scoped, tag = 'input window, operand 13, single buffered']
    #allocation7 [shape = 's32[1]{0}', space=sflag, size = 0x4, scoped, tag = 'scoped memory for tpu_custom_call.1']
    #allocation8 [shape = 'u8[8192]{0}', space=vmem, size = 0x2000, scoped, tag = 'output window, operand 0']
    %22 = vsyncpa [#allocation4], 0
    %s23 = scalar_lea.sflag [#allocation4], 1
    %24 = vsyncpa %s23, 0
    %25 = vsyncpa [#allocation7], 0
    %26 = vsyncpa [#allocation5], 0
    %s27 = scalar_lea.sflag [#allocation5], 1
    %28 = vsyncpa %s27, 0
    loop: start=0, step=1, limit=4
    $region2: #{tpu_custom_call.1} parent=1 // loop_pre_header
      _
    $region3: #{tpu_custom_call.1} parent=1 // loop_header
      %s30 = sphi 0, %s34
      %p31 = scmp.ge.s32.totalorder %s30, 4
      %s40 = sphi 0, %s42
      %s43 = sphi 0, %s40
      %s44 = sphi 0, %s43
      %s60 = sphi 0, %s44
      %s66 = sphi 0, %s68
      %s69 = sphi 0, %s66
      %s70 = sphi 0, %s69
      %s86 = sphi 0, %s70
      %s92 = sphi 0, %s94
      %s95 = sphi 0, %s92
      %s96 = sphi 0, %s95
      %s112 = sphi 0, %s96
      %s118 = sphi 0, %s120
      %s121 = sphi 0, %s118
      %s122 = sphi 0, %s121
      %s138 = sphi 0, %s122
      %s142 = sphi 0, %s142
      %s144 = sphi 0, %s142
      %s145 = sphi 0, %s144
      %s159 = sphi 0, %s145
      %s163 = sphi 0, %s163
      %s165 = sphi 0, %s163
      %s166 = sphi 0, %s165
      %s180 = sphi 0, %s166
      %s184 = sphi 0, %s184
      %s186 = sphi 0, %s184
      %s187 = sphi 0, %s186
      %s201 = sphi 0, %s187
      %s205 = sphi 0, %s205
      %s207 = sphi 0, %s205
      %s208 = sphi 0, %s207
      %s222 = sphi 0, %s208
      %s226 = sphi 0, %s226
      %s228 = sphi 0, %s226
      %s229 = sphi 0, %s228
      %s243 = sphi 0, %s229
      %s247 = sphi 0, %s247
      %s249 = sphi 0, %s247
      %s250 = sphi 0, %s249
      %s264 = sphi 0, %s250
      %s268 = sphi 0, %s268
      %s270 = sphi 0, %s268
      %s271 = sphi 0, %s270
      %s285 = sphi 0, %s271
      %s289 = sphi 0, %s289
      %s291 = sphi 0, %s289
      %s292 = sphi 0, %s291
      %s306 = sphi 0, %s292
      %s310 = sphi 0, %s310
      %s312 = sphi 0, %s310
      %s313 = sphi 0, %s312
      %s327 = sphi 0, %s313
      %s331 = sphi 0, %s331
      %s333 = sphi 0, %s331
      %s334 = sphi 0, %s333
      %s348 = sphi 0, %s334
      %s352 = sphi 0, %s352
      %s354 = sphi 0, %s352
      %s355 = sphi 0, %s354
      %s369 = sphi 0, %s355
      %s375 = sphi 0, %s377
      %s378 = sphi 0, %s375
      %s379 = sphi 0, %s378
      %s395 = sphi 0, %s379
    $region4: #{tpu_custom_call.1} parent=1 // loop_header_branch
      %33 = sbr.rel (%p31) target = $region8
    $region5: #{tpu_custom_call.1} parent=1 // loop_body
      %s35 = ssub.s32 %s30, 1
      %s36 = ssub.s32 %s30, 2
      %s37 = sadd.s32 %s30, 1
      %s38 = ssub.s32 %s30, %s37
      %p39 = scmp.eq.s32.totalorder %s38, 0
      %s41 = sadd.s32 %s40, 1
      %s42 = scalar_select %p39, %s40, %s41
      %p45 = pneg %p39
      %p46 = scmp.eq.s32.totalorder %s30, 1
      %p47 = por %p45, %p46
      %p48 = scmp.ne.s32.totalorder %s40, %s43
      %p49 = scmp.eq.s32.totalorder %s30, 0
      %p50 = por %p48, %p49
      %p51 = scmp.ne.s32.totalorder %s40, %s43
      %p52 = scmp.eq.s32.totalorder %s35, 1
      %p53 = por %p51, %p52
      %p54 = scmp.ne.s32.totalorder %s43, %s44
      %p55 = scmp.eq.s32.totalorder %s35, 0
      %p56 = por %p54, %p55
      %p57 = scmp.ne.s32.totalorder %s43, %s44
      %p58 = scmp.eq.s32.totalorder %s36, 1
      %p59 = por %p57, %p58
      %p61 = scmp.ne.s32.totalorder %s44, %s60
      %p62 = scmp.eq.s32.totalorder %s36, 0
      %p63 = por %p61, %p62
      %s64 = ssub.s32 %s30, %s37
      %p65 = scmp.eq.s32.totalorder %s64, 0
      %s67 = sadd.s32 %s66, 1
      %s68 = scalar_select %p65, %s66, %s67
      %p71 = pneg %p65
      %p72 = scmp.eq.s32.totalorder %s30, 1
      %p73 = por %p71, %p72
      %p74 = scmp.ne.s32.totalorder %s66, %s69
      %p75 = scmp.eq.s32.totalorder %s30, 0
      %p76 = por %p74, %p75
      %p77 = scmp.ne.s32.totalorder %s66, %s69
      %p78 = scmp.eq.s32.totalorder %s35, 1
      %p79 = por %p77, %p78
      %p80 = scmp.ne.s32.totalorder %s69, %s70
      %p81 = scmp.eq.s32.totalorder %s35, 0
      %p82 = por %p80, %p81
      %p83 = scmp.ne.s32.totalorder %s69, %s70
      %p84 = scmp.eq.s32.totalorder %s36, 1
      %p85 = por %p83, %p84
      %p87 = scmp.ne.s32.totalorder %s70, %s86
      %p88 = scmp.eq.s32.totalorder %s36, 0
      %p89 = por %p87, %p88
      %s90 = ssub.s32 %s30, %s37
      %p91 = scmp.eq.s32.totalorder %s90, 0
      %s93 = sadd.s32 %s92, 1
      %s94 = scalar_select %p91, %s92, %s93
      %p97 = pneg %p91
      %p98 = scmp.eq.s32.totalorder %s30, 1
      %p99 = por %p97, %p98
      %p100 = scmp.ne.s32.totalorder %s92, %s95
      %p101 = scmp.eq.s32.totalorder %s30, 0
      %p102 = por %p100, %p101
      %p103 = scmp.ne.s32.totalorder %s92, %s95
      %p104 = scmp.eq.s32.totalorder %s35, 1
      %p105 = por %p103, %p104
      %p106 = scmp.ne.s32.totalorder %s95, %s96
      %p107 = scmp.eq.s32.totalorder %s35, 0
      %p108 = por %p106, %p107
      %p109 = scmp.ne.s32.totalorder %s95, %s96
      %p110 = scmp.eq.s32.totalorder %s36, 1
      %p111 = por %p109, %p110
      %p113 = scmp.ne.s32.totalorder %s96, %s112
      %p114 = scmp.eq.s32.totalorder %s36, 0
      %p115 = por %p113, %p114
      %s116 = ssub.s32 %s30, %s37
      %p117 = scmp.eq.s32.totalorder %s116, 0
      %s119 = sadd.s32 %s118, 1
      %s120 = scalar_select %p117, %s118, %s119
      %p123 = pneg %p117
      %p124 = scmp.eq.s32.totalorder %s30, 1
      %p125 = por %p123, %p124
      %p126 = scmp.ne.s32.totalorder %s118, %s121
      %p127 = scmp.eq.s32.totalorder %s30, 0
      %p128 = por %p126, %p127
      %p129 = scmp.ne.s32.totalorder %s118, %s121
      %p130 = scmp.eq.s32.totalorder %s35, 1
      %p131 = por %p129, %p130
      %p132 = scmp.ne.s32.totalorder %s121, %s122
      %p133 = scmp.eq.s32.totalorder %s35, 0
      %p134 = por %p132, %p133
      %p135 = scmp.ne.s32.totalorder %s121, %s122
      %p136 = scmp.eq.s32.totalorder %s36, 1
      %p137 = por %p135, %p136
      %p139 = scmp.ne.s32.totalorder %s122, %s138
      %p140 = scmp.eq.s32.totalorder %s36, 0
      %p141 = por %p139, %p140
      %s143 = sadd.s32 %s142, 1
      %p146 = scmp.eq.s32.totalorder %s30, 1
      %p147 = scmp.ne.s32.totalorder %s142, %s144
      %p148 = scmp.eq.s32.totalorder %s30, 0
      %p149 = por %p147, %p148
      %p150 = scmp.ne.s32.totalorder %s142, %s144
      %p151 = scmp.eq.s32.totalorder %s35, 1
      %p152 = por %p150, %p151
      %p153 = scmp.ne.s32.totalorder %s144, %s145
      %p154 = scmp.eq.s32.totalorder %s35, 0
      %p155 = por %p153, %p154
      %p156 = scmp.ne.s32.totalorder %s144, %s145
      %p157 = scmp.eq.s32.totalorder %s36, 1
      %p158 = por %p156, %p157
      %p160 = scmp.ne.s32.totalorder %s145, %s159
      %p161 = scmp.eq.s32.totalorder %s36, 0
      %p162 = por %p160, %p161
      %s164 = sadd.s32 %s163, 1
      %p167 = scmp.eq.s32.totalorder %s30, 1
      %p168 = scmp.ne.s32.totalorder %s163, %s165
      %p169 = scmp.eq.s32.totalorder %s30, 0
      %p170 = por %p168, %p169
      %p171 = scmp.ne.s32.totalorder %s163, %s165
      %p172 = scmp.eq.s32.totalorder %s35, 1
      %p173 = por %p171, %p172
      %p174 = scmp.ne.s32.totalorder %s165, %s166
      %p175 = scmp.eq.s32.totalorder %s35, 0
      %p176 = por %p174, %p175
      %p177 = scmp.ne.s32.totalorder %s165, %s166
      %p178 = scmp.eq.s32.totalorder %s36, 1
      %p179 = por %p177, %p178
      %p181 = scmp.ne.s32.totalorder %s166, %s180
      %p182 = scmp.eq.s32.totalorder %s36, 0
      %p183 = por %p181, %p182
      %s185 = sadd.s32 %s184, 1
      %p188 = scmp.eq.s32.totalorder %s30, 1
      %p189 = scmp.ne.s32.totalorder %s184, %s186
      %p190 = scmp.eq.s32.totalorder %s30, 0
      %p191 = por %p189, %p190
      %p192 = scmp.ne.s32.totalorder %s184, %s186
      %p193 = scmp.eq.s32.totalorder %s35, 1
      %p194 = por %p192, %p193
      %p195 = scmp.ne.s32.totalorder %s186, %s187
      %p196 = scmp.eq.s32.totalorder %s35, 0
      %p197 = por %p195, %p196
      %p198 = scmp.ne.s32.totalorder %s186, %s187
      %p199 = scmp.eq.s32.totalorder %s36, 1
      %p200 = por %p198, %p199
      %p202 = scmp.ne.s32.totalorder %s187, %s201
      %p203 = scmp.eq.s32.totalorder %s36, 0
      %p204 = por %p202, %p203
      %s206 = sadd.s32 %s205, 1
      %p209 = scmp.eq.s32.totalorder %s30, 1
      %p210 = scmp.ne.s32.totalorder %s205, %s207
      %p211 = scmp.eq.s32.totalorder %s30, 0
      %p212 = por %p210, %p211
      %p213 = scmp.ne.s32.totalorder %s205, %s207
      %p214 = scmp.eq.s32.totalorder %s35, 1
      %p215 = por %p213, %p214
      %p216 = scmp.ne.s32.totalorder %s207, %s208
      %p217 = scmp.eq.s32.totalorder %s35, 0
      %p218 = por %p216, %p217
      %p219 = scmp.ne.s32.totalorder %s207, %s208
      %p220 = scmp.eq.s32.totalorder %s36, 1
      %p221 = por %p219, %p220
      %p223 = scmp.ne.s32.totalorder %s208, %s222
      %p224 = scmp.eq.s32.totalorder %s36, 0
      %p225 = por %p223, %p224
      %s227 = sadd.s32 %s226, 1
      %p230 = scmp.eq.s32.totalorder %s30, 1
      %p231 = scmp.ne.s32.totalorder %s226, %s228
      %p232 = scmp.eq.s32.totalorder %s30, 0
      %p233 = por %p231, %p232
      %p234 = scmp.ne.s32.totalorder %s226, %s228
      %p235 = scmp.eq.s32.totalorder %s35, 1
      %p236 = por %p234, %p235
      %p237 = scmp.ne.s32.totalorder %s228, %s229
      %p238 = scmp.eq.s32.totalorder %s35, 0
      %p239 = por %p237, %p238
      %p240 = scmp.ne.s32.totalorder %s228, %s229
      %p241 = scmp.eq.s32.totalorder %s36, 1
      %p242 = por %p240, %p241
      %p244 = scmp.ne.s32.totalorder %s229, %s243
      %p245 = scmp.eq.s32.totalorder %s36, 0
      %p246 = por %p244, %p245
      %s248 = sadd.s32 %s247, 1
      %p251 = scmp.eq.s32.totalorder %s30, 1
      %p252 = scmp.ne.s32.totalorder %s247, %s249
      %p253 = scmp.eq.s32.totalorder %s30, 0
      %p254 = por %p252, %p253
      %p255 = scmp.ne.s32.totalorder %s247, %s249
      %p256 = scmp.eq.s32.totalorder %s35, 1
      %p257 = por %p255, %p256
      %p258 = scmp.ne.s32.totalorder %s249, %s250
      %p259 = scmp.eq.s32.totalorder %s35, 0
      %p260 = por %p258, %p259
      %p261 = scmp.ne.s32.totalorder %s249, %s250
      %p262 = scmp.eq.s32.totalorder %s36, 1
      %p263 = por %p261, %p262
      %p265 = scmp.ne.s32.totalorder %s250, %s264
      %p266 = scmp.eq.s32.totalorder %s36, 0
      %p267 = por %p265, %p266
      %s269 = sadd.s32 %s268, 1
      %p272 = scmp.eq.s32.totalorder %s30, 1
      %p273 = scmp.ne.s32.totalorder %s268, %s270
      %p274 = scmp.eq.s32.totalorder %s30, 0
      %p275 = por %p273, %p274
      %p276 = scmp.ne.s32.totalorder %s268, %s270
      %p277 = scmp.eq.s32.totalorder %s35, 1
      %p278 = por %p276, %p277
      %p279 = scmp.ne.s32.totalorder %s270, %s271
      %p280 = scmp.eq.s32.totalorder %s35, 0
      %p281 = por %p279, %p280
      %p282 = scmp.ne.s32.totalorder %s270, %s271
      %p283 = scmp.eq.s32.totalorder %s36, 1
      %p284 = por %p282, %p283
      %p286 = scmp.ne.s32.totalorder %s271, %s285
      %p287 = scmp.eq.s32.totalorder %s36, 0
      %p288 = por %p286, %p287
      %s290 = sadd.s32 %s289, 1
      %p293 = scmp.eq.s32.totalorder %s30, 1
      %p294 = scmp.ne.s32.totalorder %s289, %s291
      %p295 = scmp.eq.s32.totalorder %s30, 0
      %p296 = por %p294, %p295
      %p297 = scmp.ne.s32.totalorder %s289, %s291
      %p298 = scmp.eq.s32.totalorder %s35, 1
      %p299 = por %p297, %p298
      %p300 = scmp.ne.s32.totalorder %s291, %s292
      %p301 = scmp.eq.s32.totalorder %s35, 0
      %p302 = por %p300, %p301
      %p303 = scmp.ne.s32.totalorder %s291, %s292
      %p304 = scmp.eq.s32.totalorder %s36, 1
      %p305 = por %p303, %p304
      %p307 = scmp.ne.s32.totalorder %s292, %s306
      %p308 = scmp.eq.s32.totalorder %s36, 0
      %p309 = por %p307, %p308
      %s311 = sadd.s32 %s310, 1
      %p314 = scmp.eq.s32.totalorder %s30, 1
      %p315 = scmp.ne.s32.totalorder %s310, %s312
      %p316 = scmp.eq.s32.totalorder %s30, 0
      %p317 = por %p315, %p316
      %p318 = scmp.ne.s32.totalorder %s310, %s312
      %p319 = scmp.eq.s32.totalorder %s35, 1
      %p320 = por %p318, %p319
      %p321 = scmp.ne.s32.totalorder %s312, %s313
      %p322 = scmp.eq.s32.totalorder %s35, 0
      %p323 = por %p321, %p322
      %p324 = scmp.ne.s32.totalorder %s312, %s313
      %p325 = scmp.eq.s32.totalorder %s36, 1
      %p326 = por %p324, %p325
      %p328 = scmp.ne.s32.totalorder %s313, %s327
      %p329 = scmp.eq.s32.totalorder %s36, 0
      %p330 = por %p328, %p329
      %s332 = sadd.s32 %s331, 1
      %p335 = scmp.eq.s32.totalorder %s30, 1
      %p336 = scmp.ne.s32.totalorder %s331, %s333
      %p337 = scmp.eq.s32.totalorder %s30, 0
      %p338 = por %p336, %p337
      %p339 = scmp.ne.s32.totalorder %s331, %s333
      %p340 = scmp.eq.s32.totalorder %s35, 1
      %p341 = por %p339, %p340
      %p342 = scmp.ne.s32.totalorder %s333, %s334
      %p343 = scmp.eq.s32.totalorder %s35, 0
      %p344 = por %p342, %p343
      %p345 = scmp.ne.s32.totalorder %s333, %s334
      %p346 = scmp.eq.s32.totalorder %s36, 1
      %p347 = por %p345, %p346
      %p349 = scmp.ne.s32.totalorder %s334, %s348
      %p350 = scmp.eq.s32.totalorder %s36, 0
      %p351 = por %p349, %p350
      %s353 = sadd.s32 %s352, 1
      %p356 = scmp.eq.s32.totalorder %s30, 1
      %p357 = scmp.ne.s32.totalorder %s352, %s354
      %p358 = scmp.eq.s32.totalorder %s30, 0
      %p359 = por %p357, %p358
      %p360 = scmp.ne.s32.totalorder %s352, %s354
      %p361 = scmp.eq.s32.totalorder %s35, 1
      %p362 = por %p360, %p361
      %p363 = scmp.ne.s32.totalorder %s354, %s355
      %p364 = scmp.eq.s32.totalorder %s35, 0
      %p365 = por %p363, %p364
      %p366 = scmp.ne.s32.totalorder %s354, %s355
      %p367 = scmp.eq.s32.totalorder %s36, 1
      %p368 = por %p366, %p367
      %p370 = scmp.ne.s32.totalorder %s355, %s369
      %p371 = scmp.eq.s32.totalorder %s36, 0
      %p372 = por %p370, %p371
      %s373 = ssub.s32 %s30, %s37
      %p374 = scmp.eq.s32.totalorder %s373, 0
      %s376 = sadd.s32 %s375, 1
      %s377 = scalar_select %p374, %s375, %s376
      %p380 = pneg %p374
      %p381 = scmp.eq.s32.totalorder %s30, 1
      %p382 = por %p380, %p381
      %p383 = scmp.ne.s32.totalorder %s375, %s378
      %p384 = scmp.eq.s32.totalorder %s30, 0
      %p385 = por %p383, %p384
      %p386 = scmp.ne.s32.totalorder %s375, %s378
      %p387 = scmp.eq.s32.totalorder %s35, 1
      %p388 = por %p386, %p387
      %p389 = scmp.ne.s32.totalorder %s378, %s379
      %p390 = scmp.eq.s32.totalorder %s35, 0
      %p391 = por %p389, %p390
      %p392 = scmp.ne.s32.totalorder %s378, %s379
      %p393 = scmp.eq.s32.totalorder %s36, 1
      %p394 = por %p392, %p393
      %p396 = scmp.ne.s32.totalorder %s379, %s395
      %p397 = scmp.eq.s32.totalorder %s36, 0
      %p398 = por %p396, %p397
      %p399 = scmp.le.s32.totalorder 1, %s30
      %p400 = scmp.lt.s32.totalorder %s30, 3
      %p401 = pnand %p399, %p400
      %p402 = pneg %p401
      // Predicated region
      $region9: #{tpu_custom_call.1} parent=5 // pred_check
        _
      $region10: #{tpu_custom_call.1} parent=5 // pred_check_branch
        %404 = sbr.rel (%p401) target = $region12
      $region11: #{tpu_custom_call.1} parent=5 // pred_region
        %s405 = ssub.s32 %s30, 1
        // Predicated region
        $region13: #{tpu_custom_call.1} parent=11 // pred_check
          %p406 = pneg %p155
        $region14: #{tpu_custom_call.1} parent=11 // pred_check_branch
          %408 = sbr.rel (%p406) target = $region16
        $region15: #{tpu_custom_call.1} parent=11 // pred_region
          _
        $region16: #{tpu_custom_call.1} parent=11 // pred_fallthru
          _
        // Predicated region
        $region17: #{tpu_custom_call.1} parent=11 // pred_check
          %p409 = pneg %p176
        $region18: #{tpu_custom_call.1} parent=11 // pred_check_branch
          %411 = sbr.rel (%p409) target = $region20
        $region19: #{tpu_custom_call.1} parent=11 // pred_region
          _
        $region20: #{tpu_custom_call.1} parent=11 // pred_fallthru
          _
        // Predicated region
        $region21: #{tpu_custom_call.1} parent=11 // pred_check
          %p412 = pneg %p197
        $region22: #{tpu_custom_call.1} parent=11 // pred_check_branch
          %414 = sbr.rel (%p412) target = $region24
        $region23: #{tpu_custom_call.1} parent=11 // pred_region
          _
        $region24: #{tpu_custom_call.1} parent=11 // pred_fallthru
          _
        // Predicated region
        $region25: #{tpu_custom_call.1} parent=11 // pred_check
          %p415 = pneg %p218
        $region26: #{tpu_custom_call.1} parent=11 // pred_check_branch
          %417 = sbr.rel (%p415) target = $region28
        $region27: #{tpu_custom_call.1} parent=11 // pred_region
          _
        $region28: #{tpu_custom_call.1} parent=11 // pred_fallthru
          _
        // Predicated region
        $region29: #{tpu_custom_call.1} parent=11 // pred_check
          %p418 = pneg %p239
        $region30: #{tpu_custom_call.1} parent=11 // pred_check_branch
          %420 = sbr.rel (%p418) target = $region32
        $region31: #{tpu_custom_call.1} parent=11 // pred_region
          _
        $region32: #{tpu_custom_call.1} parent=11 // pred_fallthru
          _
        // Predicated region
        $region33: #{tpu_custom_call.1} parent=11 // pred_check
          %p421 = pneg %p260
        $region34: #{tpu_custom_call.1} parent=11 // pred_check_branch
          %423 = sbr.rel (%p421) target = $region36
        $region35: #{tpu_custom_call.1} parent=11 // pred_region
          _
        $region36: #{tpu_custom_call.1} parent=11 // pred_fallthru
          _
        // Predicated region
        $region37: #{tpu_custom_call.1} parent=11 // pred_check
          %p424 = pneg %p281
        $region38: #{tpu_custom_call.1} parent=11 // pred_check_branch
          %426 = sbr.rel (%p424) target = $region40
        $region39: #{tpu_custom_call.1} parent=11 // pred_region
          _
        $region40: #{tpu_custom_call.1} parent=11 // pred_fallthru
          _
        // Predicated region
        $region41: #{tpu_custom_call.1} parent=11 // pred_check
          %p427 = pneg %p302
        $region42: #{tpu_custom_call.1} parent=11 // pred_check_branch
          %429 = sbr.rel (%p427) target = $region44
        $region43: #{tpu_custom_call.1} parent=11 // pred_region
          _
        $region44: #{tpu_custom_call.1} parent=11 // pred_fallthru
          _
        // Predicated region
        $region45: #{tpu_custom_call.1} parent=11 // pred_check
          %p430 = pneg %p323
        $region46: #{tpu_custom_call.1} parent=11 // pred_check_branch
          %432 = sbr.rel (%p430) target = $region48
        $region47: #{tpu_custom_call.1} parent=11 // pred_region
          _
        $region48: #{tpu_custom_call.1} parent=11 // pred_fallthru
          _
        // Predicated region
        $region49: #{tpu_custom_call.1} parent=11 // pred_check
          %p433 = pneg %p344
        $region50: #{tpu_custom_call.1} parent=11 // pred_check_branch
          %435 = sbr.rel (%p433) target = $region52
        $region51: #{tpu_custom_call.1} parent=11 // pred_region
          %s437 = ssub.s32 512, 512
          %438 = vsyncadd [#allocation7], %s437
          %s439 = sshll.u32 [#allocation6], 4
          %s440 = int_to_ptr.vmem [resolvable:$true] %s439
          %445 = dma.hbm_to_vmem [thread:$0]  %s13, 512, %s440, [#allocation7], 128, 128, 8
        $region52: #{tpu_custom_call.1} parent=11 // pred_fallthru
          _
        // Predicated region
        $region53: #{tpu_custom_call.1} parent=11 // pred_check
          %p446 = pneg %p365
        $region54: #{tpu_custom_call.1} parent=11 // pred_check_branch
          %448 = sbr.rel (%p446) target = $region56
        $region55: #{tpu_custom_call.1} parent=11 // pred_region
          _
        $region56: #{tpu_custom_call.1} parent=11 // pred_fallthru
          _
      $region12: #{tpu_custom_call.1} parent=5 // pred_fallthru
        _
      %p449 = scmp.lt.s32.totalorder %s30, 2
      // Predicated region
      $region57: #{tpu_custom_call.1} parent=5 // pred_check
        %p450 = pneg %p449
      $region58: #{tpu_custom_call.1} parent=5 // pred_check_branch
        %452 = sbr.rel (%p450) target = $region60
      $region59: #{tpu_custom_call.1} parent=5 // pred_region
        // Predicated region
        $region61: #{tpu_custom_call.1} parent=59 // pred_check
          %p453 = pneg %p50
        $region62: #{tpu_custom_call.1} parent=59 // pred_check_branch
          %455 = sbr.rel (%p453) target = $region64
        $region63: #{tpu_custom_call.1} parent=59 // pred_region
          %s456 = smul.u32 8, %s30
          %p457 = scmp.lt.s32.totalorder %s456, 15
          %s458 = scalar_select %p457, %s456, 15
          %s459 = smul.addr %s458, 8
          %s460 = scalar_lea.vmem %s0, %s459
          %s461 = smul.u32 8, %s30
        $region64: #{tpu_custom_call.1} parent=59 // pred_fallthru
          _
        // Predicated region
        $region65: #{tpu_custom_call.1} parent=59 // pred_check
          %p462 = pneg %p76
        $region66: #{tpu_custom_call.1} parent=59 // pred_check_branch
          %464 = sbr.rel (%p462) target = $region68
        $region67: #{tpu_custom_call.1} parent=59 // pred_region
          %s465 = smul.u32 8, %s30
          %p466 = scmp.lt.s32.totalorder %s465, 15
          %s467 = scalar_select %p466, %s465, 15
          %s468 = scalar_lea.vmem %s1, %s467
          %s469 = smul.u32 8, %s30
        $region68: #{tpu_custom_call.1} parent=59 // pred_fallthru
          _
        // Predicated region
        $region69: #{tpu_custom_call.1} parent=59 // pred_check
          %p470 = pneg %p102
        $region70: #{tpu_custom_call.1} parent=59 // pred_check_branch
          %472 = sbr.rel (%p470) target = $region72
        $region71: #{tpu_custom_call.1} parent=59 // pred_region
          %s473 = smul.u32 8, %s30
          %p474 = scmp.lt.s32.totalorder %s473, 15
          %s475 = scalar_select %p474, %s473, 15
          %s476 = smul.addr %s475, 8
          %s477 = scalar_lea.vmem %s2, %s476
          %s478 = smul.u32 8, %s30
        $region72: #{tpu_custom_call.1} parent=59 // pred_fallthru
          _
        // Predicated region
        $region73: #{tpu_custom_call.1} parent=59 // pred_check
          %p479 = pneg %p128
        $region74: #{tpu_custom_call.1} parent=59 // pred_check_branch
          %481 = sbr.rel (%p479) target = $region76
        $region75: #{tpu_custom_call.1} parent=59 // pred_region
          %s482 = sand.u32 %s118, 1
          %s483 = scalar_lea.sflag [#allocation4], %s482
          %s484 = sand.u32 %s118, 1
          %s485 = smul.addr %s484, 8
          %s486 = scalar_lea.vmem [#allocation3], %s485
          %s488 = ssub.s32 128, 128
          %489 = vsyncadd %s483, %s488
          %s490 = smul.addr %s30, 128
          %s491 = scalar_lea.hbm %s3, %s490
          %s493 = sshll.u32 %s486, 4
          %s494 = int_to_ptr.vmem [resolvable:$true] %s493
          %496 = dma.hbm_to_vmem [thread:$0]  %s491, 128, %s494, %s483
        $region76: #{tpu_custom_call.1} parent=59 // pred_fallthru
          _
      $region60: #{tpu_custom_call.1} parent=5 // pred_fallthru
        _
      %p497 = scmp.le.s32.totalorder 1, %s30
      %p498 = scmp.lt.s32.totalorder %s30, 3
      %p499 = pnand %p497, %p498
      %p500 = pneg %p499
      // Predicated region
      $region77: #{tpu_custom_call.1} parent=5 // pred_check
        _
      $region78: #{tpu_custom_call.1} parent=5 // pred_check_branch
        %502 = sbr.rel (%p499) target = $region80
      $region79: #{tpu_custom_call.1} parent=5 // pred_region
        %s503 = ssub.s32 %s30, 1
        %s504 = sand.u32 %s121, 1
        %s505 = scalar_lea.sflag [#allocation4], %s504
        %s506 = sand.u32 %s121, 1
        %s507 = smul.addr %s506, 8
        %s508 = scalar_lea.vmem [#allocation3], %s507
        // Predicated region
        $region81: #{tpu_custom_call.1} parent=79 // pred_check
          %p509 = pneg %p134
        $region82: #{tpu_custom_call.1} parent=79 // pred_check_branch
          %511 = sbr.rel (%p509) target = $region84
        $region83: #{tpu_custom_call.1} parent=79 // pred_region
          %512 = dma.done %s505, 128
        $region84: #{tpu_custom_call.1} parent=79 // pred_fallthru
          _
        // Predicated region
        $region85: #{tpu_custom_call.1} parent=79 // pred_check
          %p513 = pneg %p344
        $region86: #{tpu_custom_call.1} parent=79 // pred_check_branch
          %515 = sbr.rel (%p513) target = $region88
        $region87: #{tpu_custom_call.1} parent=79 // pred_region
          %516 = dma.done [#allocation7], 512
        $region88: #{tpu_custom_call.1} parent=79 // pred_fallthru
          _
        %s517 = smul.u32 8, %s35
        %p518 = scmp.lt.s32.totalorder %s517, 15
        %s519 = scalar_select %p518, %s517, 15
        %s520 = smul.addr %s519, 8
        %s521 = scalar_lea.vmem %s0, %s520
        %p522 = pneg %p56
        %p523 = pneg %p53
        %s524 = smul.u32 8, %s35
        %p525 = scmp.lt.s32.totalorder %s524, 15
        %s526 = scalar_select %p525, %s524, 15
        %s527 = scalar_lea.vmem %s1, %s526
        %p528 = pneg %p82
        %p529 = pneg %p79
        %s530 = smul.u32 8, %s35
        %p531 = scmp.lt.s32.totalorder %s530, 15
        %s532 = scalar_select %p531, %s530, 15
        %s533 = smul.addr %s532, 8
        %s534 = scalar_lea.vmem %s2, %s533
        %p535 = pneg %p108
        %p536 = pneg %p105
        %s537 = sand.u32 %s121, 1
        %s538 = scalar_lea.sflag [#allocation4], %s537
        %s539 = sand.u32 %s121, 1
        %s540 = smul.addr %s539, 8
        %s541 = scalar_lea.vmem [#allocation3], %s540
        %p542 = pneg %p134
        %p543 = pneg %p131
        %p544 = pneg %p155
        %p545 = pneg %p152
        %p546 = pneg %p176
        %p547 = pneg %p173
        %p548 = pneg %p197
        %p549 = pneg %p194
        %p550 = pneg %p218
        %p551 = pneg %p215
        %p552 = pneg %p239
        %p553 = pneg %p236
        %p554 = pneg %p260
        %p555 = pneg %p257
        %p556 = pneg %p281
        %p557 = pneg %p278
        %p558 = pneg %p302
        %p559 = pneg %p299
        %p560 = pneg %p323
        %p561 = pneg %p320
        %p562 = pneg %p344
        %p563 = pneg %p341
        %p564 = pneg %p365
        %p565 = pneg %p362
        %p566 = pneg %p391
        %p567 = pneg %p388
        %s568 = sand.u32 %s378, 1
        %s569 = scalar_lea.sflag [#allocation5], %s568
        %s570 = sand.u32 %s378, 1
        %s571 = smul.addr %s570, 8
        %s572 = scalar_lea.vmem [#allocation8], %s571
        %s573 = smul.u32 8, %s35
        %p574 = scmp.lt.s32.totalorder %s573, 15
        %s575 = scalar_select %p574, %s573, 15
        %s576 = smul.addr %s575, 8
        %s577 = scalar_lea.vmem %s0, %s576
        %s578 = smul.u32 8, %s35
        %s579 = smul.u32 8, %s35
        %p580 = scmp.lt.s32.totalorder %s579, 15
        %s581 = scalar_select %p580, %s579, 15
        %s582 = scalar_lea.vmem %s1, %s581
        %s583 = smul.u32 8, %s35
        %s584 = smul.u32 8, %s35
        %p585 = scmp.lt.s32.totalorder %s584, 15
        %s586 = scalar_select %p585, %s584, 15
        %s587 = smul.addr %s586, 8
        %s588 = scalar_lea.vmem %s2, %s587
        %s589 = smul.u32 8, %s35
        %v590 = vld [vmem:[%s577] sm:$0xff]
        %v591 = vld [vmem:[%s577 + $0x8] sm:$0xff]
        %v592 = vld [vmem:[%s577 + $0x10] sm:$0xff]
        %v593 = vld [vmem:[%s577 + $0x18] sm:$0xff]
        %v594 = vld [vmem:[%s577 + $0x20] sm:$0xff]
        %v595 = vld [vmem:[%s577 + $0x28] sm:$0xff]
        %v596 = vld [vmem:[%s577 + $0x30] sm:$0xff]
        %v597 = vld [vmem:[%s577 + $0x38] sm:$0xff]
        %v598 = vld [vmem:[%s4] sm:$0xff]
        %v599 = vld [vmem:[%s4 + $0x8] sm:$0xff]
        %v600 = vld [vmem:[%s4 + $0x10] sm:$0xff]
        %v601 = vld [vmem:[%s4 + $0x18] sm:$0xff]
        %v602 = vld [vmem:[%s4 + $0x20] sm:$0xff]
        %v603 = vld [vmem:[%s4 + $0x28] sm:$0xff]
        %v604 = vld [vmem:[%s4 + $0x30] sm:$0xff]
        %v605 = vld [vmem:[%s4 + $0x38] sm:$0xff]
        %v606 = vld [vmem:[%s5] sm:$0x1]
        %v608 = vlaneseq
        %v609 = vshrl.u32 %v608, 7
        %v610 = vsub.s32 0, %v609
        %v611 = vrot.slane %v606, %v610
        %vm613 = vcmask 523264
        %v615 = vsel %vm613, %v590, 0
        %v618 = vsel %vm613, %v591, 0
        %v621 = vsel %vm613, %v592, 0
        %v624 = vsel %vm613, %v593, 0
        %v627 = vsel %vm613, %v594, 0
        %v630 = vsel %vm613, %v595, 0
        %v633 = vsel %vm613, %v596, 0
        %v636 = vsel %vm613, %v597, 0
        %638 = vmatprep.subr.mxu0 0.0
        %639 = vmatpush1.msra.mxu0 0.0
        %640 = vmatprep.subr.mxu0 0.0
        %641 = vmatpush1.msra.mxu0 0.0
        %642 = vmatprep.subr.mxu0 0.0
        %643 = vmatpush1.msra.mxu0 0.0
        %644 = vmatprep.subr.mxu0 0.0
        %645 = vmatpush1.msra.mxu0 0.0
        %646 = vmatprep.subr.mxu0 0.0
        %647 = vmatpush1.msra.mxu0 0.0
        %648 = vmatprep.subr.mxu0 0.0
        %649 = vmatpush1.msra.mxu0 0.0
        %650 = vmatprep.subr.mxu0 0.0
        %651 = vmatpush1.msra.mxu0 0.0
        %652 = vmatprep.subr.mxu0 0.0
        %653 = vmatpush1.msra.mxu0 0.0
        %654 = vmatprep.subr.mxu0 0.0
        %655 = vmatpush1.msra.mxu0 %v605
        %656 = vmatprep.subr.mxu0 0.0
        %657 = vmatpush1.msra.mxu0 %v604
        %658 = vmatprep.subr.mxu0 0.0
        %659 = vmatpush1.msra.mxu0 %v603
        %660 = vmatprep.subr.mxu0 0.0
        %661 = vmatpush1.msra.mxu0 %v602
        %662 = vmatprep.subr.mxu0 0.0
        %663 = vmatpush1.msra.mxu0 %v601
        %664 = vmatprep.subr.mxu0 0.0
        %665 = vmatpush1.msra.mxu0 %v600
        %666 = vmatprep.subr.mxu0 0.0
        %667 = vmatpush1.msra.mxu0 %v599
        %668 = vmatprep.subr.mxu0 0.0
        %669 = vmatpush1.msra.mxu0 %v598
        %670 = vmatprep.subr.mxu0 0.0
        %671 = vmatpush2.msra.mxu0 0.0
        %672 = vmatprep.subr.mxu0 0.0
        %673 = vmatpush2.msra.mxu0 0.0
        %674 = vmatprep.subr.mxu0 0.0
        %675 = vmatpush2.msra.mxu0 0.0
        %676 = vmatprep.subr.mxu0 0.0
        %677 = vmatpush2.msra.mxu0 0.0
        %678 = vmatprep.subr.mxu0 0.0
        %679 = vmatpush2.msra.mxu0 0.0
        %680 = vmatprep.subr.mxu0 0.0
        %681 = vmatpush2.msra.mxu0 0.0
        %682 = vmatprep.subr.mxu0 0.0
        %683 = vmatpush2.msra.mxu0 0.0
        %684 = vmatprep.subr.mxu0 0.0
        %685 = vmatpush2.msra.mxu0 0.0
        %686 = vmatprep.subr.mxu0 0.0
        %687 = vmatpush2.msra.mxu0 0.0
        %688 = vmatprep.subr.mxu0 0.0
        %689 = vmatpush2.msra.mxu0 0.0
        %690 = vmatprep.subr.mxu0 0.0
        %691 = vmatpush2.msra.mxu0 0.0
        %692 = vmatprep.subr.mxu0 0.0
        %693 = vmatpush2.msra.mxu0 0.0
        %694 = vmatprep.subr.mxu0 0.0
        %695 = vmatpush2.msra.mxu0 0.0
        %696 = vmatprep.subr.mxu0 0.0
        %697 = vmatpush2.msra.mxu0 0.0
        %698 = vmatprep.subr.mxu0 0.0
        %699 = vmatpush2.msra.mxu0 0.0
        %700 = vmatprep.subr.mxu0 0.0
        %701 = vmatpush2.msra.mxu0 0.0
        %702 = vmatprep.mubr.f32.mxu0 0.0
        %703 = vmatmul.mubr.f32.gmra.mxu0 %v615
        %v704 = vpop.f32.mrf.mxu0
        %v705 = vadd.f32 %v611, %v704
        %v706 = vpop.f32.mrf.mxu0
        %707 = vmatprep.mubr.f32.mxu0 0.0
        %708 = vmatmul.mubr.f32.gmra.mxu0 %v618
        %v709 = vpop.f32.mrf.mxu0
        %v710 = vadd.f32 %v611, %v709
        %v711 = vpop.f32.mrf.mxu0
        %712 = vmatprep.mubr.f32.mxu0 0.0
        %713 = vmatmul.mubr.f32.gmra.mxu0 %v621
        %v714 = vpop.f32.mrf.mxu0
        %v715 = vadd.f32 %v611, %v714
        %v716 = vpop.f32.mrf.mxu0
        %717 = vmatprep.mubr.f32.mxu0 0.0
        %718 = vmatmul.mubr.f32.gmra.mxu0 %v624
        %v719 = vpop.f32.mrf.mxu0
        %v720 = vadd.f32 %v611, %v719
        %v721 = vpop.f32.mrf.mxu0
        %722 = vmatprep.mubr.f32.mxu0 0.0
        %723 = vmatmul.mubr.f32.gmra.mxu0 %v627
        %v724 = vpop.f32.mrf.mxu0
        %v725 = vadd.f32 %v611, %v724
        %v726 = vpop.f32.mrf.mxu0
        %727 = vmatprep.mubr.f32.mxu0 0.0
        %728 = vmatmul.mubr.f32.gmra.mxu0 %v630
        %v729 = vpop.f32.mrf.mxu0
        %v730 = vadd.f32 %v611, %v729
        %v731 = vpop.f32.mrf.mxu0
        %732 = vmatprep.mubr.f32.mxu0 0.0
        %733 = vmatmul.mubr.f32.gmra.mxu0 %v633
        %v734 = vpop.f32.mrf.mxu0
        %v735 = vadd.f32 %v611, %v734
        %v736 = vpop.f32.mrf.mxu0
        %737 = vmatprep.mubr.f32.mxu0 0.0
        %738 = vmatmul.mubr.f32.gmra.mxu0 %v636
        %v739 = vpop.f32.mrf.mxu0
        %v740 = vadd.f32 %v611, %v739
        %v741 = vpop.f32.mrf.mxu0
        %742 = vdwg.mxu0
        %v743 = vmax.f32 %v705, 0.0
        %v744 = vmax.f32 %v710, 0.0
        %v745 = vmax.f32 %v715, 0.0
        %v746 = vmax.f32 %v720, 0.0
        %v747 = vmax.f32 %v725, 0.0
        %v748 = vmax.f32 %v730, 0.0
        %v749 = vmax.f32 %v735, 0.0
        %v750 = vmax.f32 %v740, 0.0
        %v751 = vld [vmem:[%s6] sm:$0xff]
        %v752 = vld [vmem:[%s6 + $0x8] sm:$0xff]
        %v753 = vld [vmem:[%s6 + $0x10] sm:$0xff]
        %v754 = vld [vmem:[%s6 + $0x18] sm:$0xff]
        %v755 = vld [vmem:[%s7] sm:$0x1]
        %v757 = vlaneseq
        %v758 = vshrl.u32 %v757, 7
        %v759 = vsub.s32 0, %v758
        %v760 = vrot.slane %v755, %v759
        %vm762 = vcmask 261120
        %v764 = vsel %vm762, %v743, 0
        %v767 = vsel %vm762, %v744, 0
        %v770 = vsel %vm762, %v745, 0
        %v773 = vsel %vm762, %v746, 0
        %v776 = vsel %vm762, %v747, 0
        %v779 = vsel %vm762, %v748, 0
        %v782 = vsel %vm762, %v749, 0
        %v785 = vsel %vm762, %v750, 0
        %787 = vmatprep.subr.mxu0 0.0
        %788 = vmatpush1.msra.mxu0 0.0
        %789 = vmatprep.subr.mxu0 0.0
        %790 = vmatpush1.msra.mxu0 0.0
        %791 = vmatprep.subr.mxu0 0.0
        %792 = vmatpush1.msra.mxu0 0.0
        %793 = vmatprep.subr.mxu0 0.0
        %794 = vmatpush1.msra.mxu0 0.0
        %795 = vmatprep.subr.mxu0 0.0
        %796 = vmatpush1.msra.mxu0 0.0
        %797 = vmatprep.subr.mxu0 0.0
        %798 = vmatpush1.msra.mxu0 0.0
        %799 = vmatprep.subr.mxu0 0.0
        %800 = vmatpush1.msra.mxu0 0.0
        %801 = vmatprep.subr.mxu0 0.0
        %802 = vmatpush1.msra.mxu0 0.0
        %803 = vmatprep.subr.mxu0 0.0
        %804 = vmatpush1.msra.mxu0 0.0
        %805 = vmatprep.subr.mxu0 0.0
        %806 = vmatpush1.msra.mxu0 0.0
        %807 = vmatprep.subr.mxu0 0.0
        %808 = vmatpush1.msra.mxu0 0.0
        %809 = vmatprep.subr.mxu0 0.0
        %810 = vmatpush1.msra.mxu0 0.0
        %811 = vmatprep.subr.mxu0 0.0
        %812 = vmatpush1.msra.mxu0 %v754
        %813 = vmatprep.subr.mxu0 0.0
        %814 = vmatpush1.msra.mxu0 %v753
        %815 = vmatprep.subr.mxu0 0.0
        %816 = vmatpush1.msra.mxu0 %v752
        %817 = vmatprep.subr.mxu0 0.0
        %818 = vmatpush1.msra.mxu0 %v751
        %819 = vmatprep.subr.mxu0 0.0
        %820 = vmatpush2.msra.mxu0 0.0
        %821 = vmatprep.subr.mxu0 0.0
        %822 = vmatpush2.msra.mxu0 0.0
        %823 = vmatprep.subr.mxu0 0.0
        %824 = vmatpush2.msra.mxu0 0.0
        %825 = vmatprep.subr.mxu0 0.0
        %826 = vmatpush2.msra.mxu0 0.0
        %827 = vmatprep.subr.mxu0 0.0
        %828 = vmatpush2.msra.mxu0 0.0
        %829 = vmatprep.subr.mxu0 0.0
        %830 = vmatpush2.msra.mxu0 0.0
        %831 = vmatprep.subr.mxu0 0.0
        %832 = vmatpush2.msra.mxu0 0.0
        %833 = vmatprep.subr.mxu0 0.0
        %834 = vmatpush2.msra.mxu0 0.0
        %835 = vmatprep.subr.mxu0 0.0
        %836 = vmatpush2.msra.mxu0 0.0
        %837 = vmatprep.subr.mxu0 0.0
        %838 = vmatpush2.msra.mxu0 0.0
        %839 = vmatprep.subr.mxu0 0.0
        %840 = vmatpush2.msra.mxu0 0.0
        %841 = vmatprep.subr.mxu0 0.0
        %842 = vmatpush2.msra.mxu0 0.0
        %843 = vmatprep.subr.mxu0 0.0
        %844 = vmatpush2.msra.mxu0 0.0
        %845 = vmatprep.subr.mxu0 0.0
        %846 = vmatpush2.msra.mxu0 0.0
        %847 = vmatprep.subr.mxu0 0.0
        %848 = vmatpush2.msra.mxu0 0.0
        %849 = vmatprep.subr.mxu0 0.0
        %850 = vmatpush2.msra.mxu0 0.0
        %851 = vmatprep.mubr.f32.mxu0 0.0
        %852 = vmatmul.mubr.f32.gmra.mxu0 %v764
        %v853 = vpop.f32.mrf.mxu0
        %v854 = vadd.f32 %v760, %v853
        %v855 = vpop.f32.mrf.mxu0
        %856 = vmatprep.mubr.f32.mxu0 0.0
        %857 = vmatmul.mubr.f32.gmra.mxu0 %v767
        %v858 = vpop.f32.mrf.mxu0
        %v859 = vadd.f32 %v760, %v858
        %v860 = vpop.f32.mrf.mxu0
        %861 = vmatprep.mubr.f32.mxu0 0.0
        %862 = vmatmul.mubr.f32.gmra.mxu0 %v770
        %v863 = vpop.f32.mrf.mxu0
        %v864 = vadd.f32 %v760, %v863
        %v865 = vpop.f32.mrf.mxu0
        %866 = vmatprep.mubr.f32.mxu0 0.0
        %867 = vmatmul.mubr.f32.gmra.mxu0 %v773
        %v868 = vpop.f32.mrf.mxu0
        %v869 = vadd.f32 %v760, %v868
        %v870 = vpop.f32.mrf.mxu0
        %871 = vmatprep.mubr.f32.mxu0 0.0
        %872 = vmatmul.mubr.f32.gmra.mxu0 %v776
        %v873 = vpop.f32.mrf.mxu0
        %v874 = vadd.f32 %v760, %v873
        %v875 = vpop.f32.mrf.mxu0
        %876 = vmatprep.mubr.f32.mxu0 0.0
        %877 = vmatmul.mubr.f32.gmra.mxu0 %v779
        %v878 = vpop.f32.mrf.mxu0
        %v879 = vadd.f32 %v760, %v878
        %v880 = vpop.f32.mrf.mxu0
        %881 = vmatprep.mubr.f32.mxu0 0.0
        %882 = vmatmul.mubr.f32.gmra.mxu0 %v782
        %v883 = vpop.f32.mrf.mxu0
        %v884 = vadd.f32 %v760, %v883
        %v885 = vpop.f32.mrf.mxu0
        %886 = vmatprep.mubr.f32.mxu0 0.0
        %887 = vmatmul.mubr.f32.gmra.mxu0 %v785
        %v888 = vpop.f32.mrf.mxu0
        %v889 = vadd.f32 %v760, %v888
        %v890 = vpop.f32.mrf.mxu0
        %891 = vdwg.mxu0
        %v892 = vld [vmem:[%s8] sm:$0xff]
        %v893 = vld [vmem:[%s8 + $0x8] sm:$0xff]
        %v894 = vld [vmem:[%s8 + $0x10] sm:$0xff]
        %v895 = vld [vmem:[%s8 + $0x18] sm:$0xff]
        %896 = vmatprep.subr.mxu0 0.0
        %897 = vmatpush1.msra.mxu0 0.0
        %898 = vmatprep.subr.mxu0 0.0
        %899 = vmatpush1.msra.mxu0 0.0
        %900 = vmatprep.subr.mxu0 0.0
        %901 = vmatpush1.msra.mxu0 0.0
        %902 = vmatprep.subr.mxu0 0.0
        %903 = vmatpush1.msra.mxu0 0.0
        %904 = vmatprep.subr.mxu0 0.0
        %905 = vmatpush1.msra.mxu0 0.0
        %906 = vmatprep.subr.mxu0 0.0
        %907 = vmatpush1.msra.mxu0 0.0
        %908 = vmatprep.subr.mxu0 0.0
        %909 = vmatpush1.msra.mxu0 0.0
        %910 = vmatprep.subr.mxu0 0.0
        %911 = vmatpush1.msra.mxu0 0.0
        %912 = vmatprep.subr.mxu0 0.0
        %913 = vmatpush1.msra.mxu0 0.0
        %914 = vmatprep.subr.mxu0 0.0
        %915 = vmatpush1.msra.mxu0 0.0
        %916 = vmatprep.subr.mxu0 0.0
        %917 = vmatpush1.msra.mxu0 0.0
        %918 = vmatprep.subr.mxu0 0.0
        %919 = vmatpush1.msra.mxu0 0.0
        %920 = vmatprep.subr.mxu0 0.0
        %921 = vmatpush1.msra.mxu0 %v895
        %922 = vmatprep.subr.mxu0 0.0
        %923 = vmatpush1.msra.mxu0 %v894
        %924 = vmatprep.subr.mxu0 0.0
        %925 = vmatpush1.msra.mxu0 %v893
        %926 = vmatprep.subr.mxu0 0.0
        %927 = vmatpush1.msra.mxu0 %v892
        %928 = vmatprep.subr.mxu0 0.0
        %929 = vmatpush2.msra.mxu0 0.0
        %930 = vmatprep.subr.mxu0 0.0
        %931 = vmatpush2.msra.mxu0 0.0
        %932 = vmatprep.subr.mxu0 0.0
        %933 = vmatpush2.msra.mxu0 0.0
        %934 = vmatprep.subr.mxu0 0.0
        %935 = vmatpush2.msra.mxu0 0.0
        %936 = vmatprep.subr.mxu0 0.0
        %937 = vmatpush2.msra.mxu0 0.0
        %938 = vmatprep.subr.mxu0 0.0
        %939 = vmatpush2.msra.mxu0 0.0
        %940 = vmatprep.subr.mxu0 0.0
        %941 = vmatpush2.msra.mxu0 0.0
        %942 = vmatprep.subr.mxu0 0.0
        %943 = vmatpush2.msra.mxu0 0.0
        %944 = vmatprep.subr.mxu0 0.0
        %945 = vmatpush2.msra.mxu0 0.0
        %946 = vmatprep.subr.mxu0 0.0
        %947 = vmatpush2.msra.mxu0 0.0
        %948 = vmatprep.subr.mxu0 0.0
        %949 = vmatpush2.msra.mxu0 0.0
        %950 = vmatprep.subr.mxu0 0.0
        %951 = vmatpush2.msra.mxu0 0.0
        %952 = vmatprep.subr.mxu0 0.0
        %953 = vmatpush2.msra.mxu0 0.0
        %954 = vmatprep.subr.mxu0 0.0
        %955 = vmatpush2.msra.mxu0 0.0
        %956 = vmatprep.subr.mxu0 0.0
        %957 = vmatpush2.msra.mxu0 0.0
        %958 = vmatprep.subr.mxu0 0.0
        %959 = vmatpush2.msra.mxu0 0.0
        %960 = vmatprep.mubr.f32.mxu0 0.0
        %961 = vmatmul.mubr.f32.gmra.mxu0 %v764
        %v962 = vpop.f32.mrf.mxu0
        %v963 = vadd.f32 0.0, %v962
        %v964 = vpop.f32.mrf.mxu0
        %965 = vmatprep.mubr.f32.mxu0 0.0
        %966 = vmatmul.mubr.f32.gmra.mxu0 %v767
        %v967 = vpop.f32.mrf.mxu0
        %v968 = vadd.f32 0.0, %v967
        %v969 = vpop.f32.mrf.mxu0
        %970 = vmatprep.mubr.f32.mxu0 0.0
        %971 = vmatmul.mubr.f32.gmra.mxu0 %v770
        %v972 = vpop.f32.mrf.mxu0
        %v973 = vadd.f32 0.0, %v972
        %v974 = vpop.f32.mrf.mxu0
        %975 = vmatprep.mubr.f32.mxu0 0.0
        %976 = vmatmul.mubr.f32.gmra.mxu0 %v773
        %v977 = vpop.f32.mrf.mxu0
        %v978 = vadd.f32 0.0, %v977
        %v979 = vpop.f32.mrf.mxu0
        %980 = vmatprep.mubr.f32.mxu0 0.0
        %981 = vmatmul.mubr.f32.gmra.mxu0 %v776
        %v982 = vpop.f32.mrf.mxu0
        %v983 = vadd.f32 0.0, %v982
        %v984 = vpop.f32.mrf.mxu0
        %985 = vmatprep.mubr.f32.mxu0 0.0
        %986 = vmatmul.mubr.f32.gmra.mxu0 %v779
        %v987 = vpop.f32.mrf.mxu0
        %v988 = vadd.f32 0.0, %v987
        %v989 = vpop.f32.mrf.mxu0
        %990 = vmatprep.mubr.f32.mxu0 0.0
        %991 = vmatmul.mubr.f32.gmra.mxu0 %v782
        %v992 = vpop.f32.mrf.mxu0
        %v993 = vadd.f32 0.0, %v992
        %v994 = vpop.f32.mrf.mxu0
        %995 = vmatprep.mubr.f32.mxu0 0.0
        %996 = vmatmul.mubr.f32.gmra.mxu0 %v785
        %v997 = vpop.f32.mrf.mxu0
        %v998 = vadd.f32 0.0, %v997
        %v999 = vpop.f32.mrf.mxu0
        %1000 = vdwg.mxu0
        %v1001 = vld [vmem:[%s508] sm:$0xff]
        %v1002 = vld [vmem:[%s9] sm:$0xff]
        %v1003 = vld [vmem:[%s9 + $0x8] sm:$0xff]
        %v1004 = vld [vmem:[%s9 + $0x10] sm:$0xff]
        %v1005 = vld [vmem:[%s9 + $0x18] sm:$0xff]
        %v1007 = vsel %vm762, %v1001, 0
        %1009 = vmatprep.subr.mxu0 0.0
        %1010 = vmatpush1.msra.mxu0 0.0
        %1011 = vmatprep.subr.mxu0 0.0
        %1012 = vmatpush1.msra.mxu0 0.0
        %1013 = vmatprep.subr.mxu0 0.0
        %1014 = vmatpush1.msra.mxu0 0.0
        %1015 = vmatprep.subr.mxu0 0.0
        %1016 = vmatpush1.msra.mxu0 0.0
        %1017 = vmatprep.subr.mxu0 0.0
        %1018 = vmatpush1.msra.mxu0 0.0
        %1019 = vmatprep.subr.mxu0 0.0
        %1020 = vmatpush1.msra.mxu0 0.0
        %1021 = vmatprep.subr.mxu0 0.0
        %1022 = vmatpush1.msra.mxu0 0.0
        %1023 = vmatprep.subr.mxu0 0.0
        %1024 = vmatpush1.msra.mxu0 0.0
        %1025 = vmatprep.subr.mxu0 0.0
        %1026 = vmatpush1.msra.mxu0 0.0
        %1027 = vmatprep.subr.mxu0 0.0
        %1028 = vmatpush1.msra.mxu0 0.0
        %1029 = vmatprep.subr.mxu0 0.0
        %1030 = vmatpush1.msra.mxu0 0.0
        %1031 = vmatprep.subr.mxu0 0.0
        %1032 = vmatpush1.msra.mxu0 0.0
        %1033 = vmatprep.subr.mxu0 0.0
        %1034 = vmatpush1.msra.mxu0 %v1005
        %1035 = vmatprep.subr.mxu0 0.0
        %1036 = vmatpush1.msra.mxu0 %v1004
        %1037 = vmatprep.subr.mxu0 0.0
        %1038 = vmatpush1.msra.mxu0 %v1003
        %1039 = vmatprep.subr.mxu0 0.0
        %1040 = vmatpush1.msra.mxu0 %v1002
        %1041 = vmatprep.subr.mxu0 0.0
        %1042 = vmatpush2.msra.mxu0 0.0
        %1043 = vmatprep.subr.mxu0 0.0
        %1044 = vmatpush2.msra.mxu0 0.0
        %1045 = vmatprep.subr.mxu0 0.0
        %1046 = vmatpush2.msra.mxu0 0.0
        %1047 = vmatprep.subr.mxu0 0.0
        %1048 = vmatpush2.msra.mxu0 0.0
        %1049 = vmatprep.subr.mxu0 0.0
        %1050 = vmatpush2.msra.mxu0 0.0
        %1051 = vmatprep.subr.mxu0 0.0
        %1052 = vmatpush2.msra.mxu0 0.0
        %1053 = vmatprep.subr.mxu0 0.0
        %1054 = vmatpush2.msra.mxu0 0.0
        %1055 = vmatprep.subr.mxu0 0.0
        %1056 = vmatpush2.msra.mxu0 0.0
        %1057 = vmatprep.subr.mxu0 0.0
        %1058 = vmatpush2.msra.mxu0 0.0
        %1059 = vmatprep.subr.mxu0 0.0
        %1060 = vmatpush2.msra.mxu0 0.0
        %1061 = vmatprep.subr.mxu0 0.0
        %1062 = vmatpush2.msra.mxu0 0.0
        %1063 = vmatprep.subr.mxu0 0.0
        %1064 = vmatpush2.msra.mxu0 0.0
        %1065 = vmatprep.subr.mxu0 0.0
        %1066 = vmatpush2.msra.mxu0 0.0
        %1067 = vmatprep.subr.mxu0 0.0
        %1068 = vmatpush2.msra.mxu0 0.0
        %1069 = vmatprep.subr.mxu0 0.0
        %1070 = vmatpush2.msra.mxu0 0.0
        %1071 = vmatprep.subr.mxu0 0.0
        %1072 = vmatpush2.msra.mxu0 0.0
        %1073 = vmatprep.mubr.f32.mxu0 0.0
        %1074 = vmatmul.mubr.f32.gmra.mxu0 %v1007
        %v1075 = vpop.f32.mrf.mxu0
        %v1076 = vadd.f32 0.0, %v1075
        %v1077 = vpop.f32.mrf.mxu0
        %1078 = vdwg.mxu0
        %v1079 = vld [vmem:[%s588] sm:$0xff]
        %v1080 = vld [vmem:[%s588 + $0x8] sm:$0xff]
        %v1081 = vld [vmem:[%s588 + $0x10] sm:$0xff]
        %v1082 = vld [vmem:[%s588 + $0x18] sm:$0xff]
        %v1083 = vld [vmem:[%s588 + $0x20] sm:$0xff]
        %v1084 = vld [vmem:[%s588 + $0x28] sm:$0xff]
        %v1085 = vld [vmem:[%s588 + $0x30] sm:$0xff]
        %v1086 = vld [vmem:[%s588 + $0x38] sm:$0xff]
        %v1088 = vcombine.high %v1076, %v1076
        %v1090 = vunpack.c.l.s4 1966171168
        %v1091 = vunpack.c.0.s8 %v1090
        %v1092 = vlaneseq
        %v1093 = vshrl.u32 %v1092, 7
        %v1094 = vsub.s32 %v1091, %v1093
        %v1095 = vrot.slane %v1076, %v1094
        %v1097 = vunpack.c.l.s4 1966171168
        %v1098 = vunpack.c.0.s8 %v1097
        %v1099 = vlaneseq
        %v1100 = vshrl.u32 %v1099, 7
        %v1101 = vsub.s32 %v1098, %v1100
        %v1102 = vrot.slane %v1088, %v1101
        %v1103 = vcombine.high %v1095, %v1095
        %v1104 = vcombine.high %v1102, %v1102
        %v1106 = vunpack.c.l.s4 1966171168
        %v1107 = vunpack.c.0.s8 %v1106
        %v1108 = vlaneseq
        %v1109 = vshrl.u32 %v1108, 7
        %v1110 = vsub.s32 %v1107, %v1109
        %v1111 = vrot.slane %v1095, %v1110
        %v1113 = vunpack.c.l.s4 1966171168
        %v1114 = vunpack.c.0.s8 %v1113
        %v1115 = vlaneseq
        %v1116 = vshrl.u32 %v1115, 7
        %v1117 = vsub.s32 %v1114, %v1116
        %v1118 = vrot.slane %v1102, %v1117
        %v1120 = vunpack.c.l.s4 1966171168
        %v1121 = vunpack.c.0.s8 %v1120
        %v1122 = vlaneseq
        %v1123 = vshrl.u32 %v1122, 7
        %v1124 = vsub.s32 %v1121, %v1123
        %v1125 = vrot.slane %v1103, %v1124
        %v1127 = vunpack.c.l.s4 1966171168
        %v1128 = vunpack.c.0.s8 %v1127
        %v1129 = vlaneseq
        %v1130 = vshrl.u32 %v1129, 7
        %v1131 = vsub.s32 %v1128, %v1130
        %v1132 = vrot.slane %v1104, %v1131
        %v1133 = vcombine.high %v1111, %v1111
        %v1134 = vcombine.high %v1118, %v1118
        %v1135 = vcombine.high %v1125, %v1125
        %v1136 = vcombine.high %v1132, %v1132
        %1138 = vset.pattern.permute.xlu0 0
        %1139 = vperm.xlu0 %1138, %v1079
        %v1140 = vpop.permute.xlu0 %1139
        %1143 = vset.pattern.permute.xlu0 0
        %1144 = vperm.xlu0 %1143, %v1080
        %v1145 = vpop.permute.xlu0 %1144
        %1148 = vset.pattern.permute.xlu0 0
        %1149 = vperm.xlu0 %1148, %v1081
        %v1150 = vpop.permute.xlu0 %1149
        %1153 = vset.pattern.permute.xlu0 0
        %1154 = vperm.xlu0 %1153, %v1082
        %v1155 = vpop.permute.xlu0 %1154
        %1158 = vset.pattern.permute.xlu0 0
        %1159 = vperm.xlu0 %1158, %v1083
        %v1160 = vpop.permute.xlu0 %1159
        %1163 = vset.pattern.permute.xlu0 0
        %1164 = vperm.xlu0 %1163, %v1084
        %v1165 = vpop.permute.xlu0 %1164
        %1168 = vset.pattern.permute.xlu0 0
        %1169 = vperm.xlu0 %1168, %v1085
        %v1170 = vpop.permute.xlu0 %1169
        %1173 = vset.pattern.permute.xlu0 0
        %1174 = vperm.xlu0 %1173, %v1086
        %v1175 = vpop.permute.xlu0 %1174
        %v1177 = vlaneseq
        %v1178 = vshrl.u32 %v1177, 7
        %v1179 = vsub.s32 0, %v1178
        %v1180 = vrot.slane %v1111, %v1179
        %v1181 = vlaneseq
        %v1182 = vshrl.u32 %v1181, 7
        %v1183 = vsub.s32 0, %v1182
        %v1184 = vrot.slane %v1125, %v1183
        %v1185 = vlaneseq
        %v1186 = vshrl.u32 %v1185, 7
        %v1187 = vsub.s32 0, %v1186
        %v1188 = vrot.slane %v1133, %v1187
        %v1189 = vlaneseq
        %v1190 = vshrl.u32 %v1189, 7
        %v1191 = vsub.s32 0, %v1190
        %v1192 = vrot.slane %v1135, %v1191
        %v1193 = vlaneseq
        %v1194 = vshrl.u32 %v1193, 7
        %v1195 = vsub.s32 0, %v1194
        %v1196 = vrot.slane %v1118, %v1195
        %v1197 = vlaneseq
        %v1198 = vshrl.u32 %v1197, 7
        %v1199 = vsub.s32 0, %v1198
        %v1200 = vrot.slane %v1132, %v1199
        %v1201 = vlaneseq
        %v1202 = vshrl.u32 %v1201, 7
        %v1203 = vsub.s32 0, %v1202
        %v1204 = vrot.slane %v1134, %v1203
        %v1205 = vlaneseq
        %v1206 = vshrl.u32 %v1205, 7
        %v1207 = vsub.s32 0, %v1206
        %v1208 = vrot.slane %v1136, %v1207
        %v1217 = vmul.f32 %v1140, %v1180
        %v1218 = vmul.f32 %v1145, %v1184
        %v1219 = vmul.f32 %v1150, %v1188
        %v1220 = vmul.f32 %v1155, %v1192
        %v1221 = vmul.f32 %v1160, %v1196
        %v1222 = vmul.f32 %v1165, %v1200
        %v1223 = vmul.f32 %v1170, %v1204
        %v1224 = vmul.f32 %v1175, %v1208
        %v1225 = vadd.f32 %v963, %v1217
        %v1226 = vadd.f32 %v968, %v1218
        %v1227 = vadd.f32 %v973, %v1219
        %v1228 = vadd.f32 %v978, %v1220
        %v1229 = vadd.f32 %v983, %v1221
        %v1230 = vadd.f32 %v988, %v1222
        %v1231 = vadd.f32 %v993, %v1223
        %v1232 = vadd.f32 %v998, %v1224
        %v1233 = vld [vmem:[%s10] sm:$0x1]
        %v1235 = vlaneseq
        %v1236 = vshrl.u32 %v1235, 7
        %v1237 = vsub.s32 0, %v1236
        %v1238 = vrot.slane %v1233, %v1237
        %v1240 = vadd.f32 %v1225, %v1238
        %v1241 = vadd.f32 %v1226, %v1238
        %v1242 = vadd.f32 %v1227, %v1238
        %v1243 = vadd.f32 %v1228, %v1238
        %v1244 = vadd.f32 %v1229, %v1238
        %v1245 = vadd.f32 %v1230, %v1238
        %v1246 = vadd.f32 %v1231, %v1238
        %v1247 = vadd.f32 %v1232, %v1238
        %v1248 = vmax.f32 %v1240, 0.0
        %v1249 = vmax.f32 %v1241, 0.0
        %v1250 = vmax.f32 %v1242, 0.0
        %v1251 = vmax.f32 %v1243, 0.0
        %v1252 = vmax.f32 %v1244, 0.0
        %v1253 = vmax.f32 %v1245, 0.0
        %v1254 = vmax.f32 %v1246, 0.0
        %v1255 = vmax.f32 %v1247, 0.0
        %v1256 = vld [vmem:[%s11] sm:$0x1]
        %v1257 = vld [vmem:[#allocation2] sm:$0x1]
        %1259 = vset.pattern.permute.xlu0 0
        %1260 = vperm.xlu0 %1259, %v1257
        %v1261 = vpop.permute.xlu0 %1260
        %v1263 = vlaneseq
        %v1264 = vshrl.u32 %v1263, 7
        %v1265 = vsub.s32 0, %v1264
        %v1266 = vrot.slane %v1261, %v1265
        %v1268 = vsel %vm762, %v1256, 0
        %v1271 = vsel %vm762, %v1248, 0
        %1273 = vmatprep.subr.mxu0 0.0
        %1274 = vmatpush1.xpose.msra.mxu0 0.0
        %1275 = vmatprep.subr.mxu0 0.0
        %1276 = vmatpush1.xpose.msra.mxu0 0.0
        %1277 = vmatprep.subr.mxu0 0.0
        %1278 = vmatpush1.xpose.msra.mxu0 0.0
        %1279 = vmatprep.subr.mxu0 0.0
        %1280 = vmatpush1.xpose.msra.mxu0 0.0
        %1281 = vmatprep.subr.mxu0 0.0
        %1282 = vmatpush1.xpose.msra.mxu0 0.0
        %1283 = vmatprep.subr.mxu0 0.0
        %1284 = vmatpush1.xpose.msra.mxu0 0.0
        %1285 = vmatprep.subr.mxu0 0.0
        %1286 = vmatpush1.xpose.msra.mxu0 0.0
        %1287 = vmatprep.subr.mxu0 0.0
        %1288 = vmatpush1.xpose.msra.mxu0 0.0
        %1289 = vmatprep.subr.mxu0 0.0
        %1290 = vmatpush1.xpose.msra.mxu0 0.0
        %1291 = vmatprep.subr.mxu0 0.0
        %1292 = vmatpush1.xpose.msra.mxu0 0.0
        %1293 = vmatprep.subr.mxu0 0.0
        %1294 = vmatpush1.xpose.msra.mxu0 0.0
        %1295 = vmatprep.subr.mxu0 0.0
        %1296 = vmatpush1.xpose.msra.mxu0 0.0
        %1297 = vmatprep.subr.mxu0 0.0
        %1298 = vmatpush1.xpose.msra.mxu0 0.0
        %1299 = vmatprep.subr.mxu0 0.0
        %1300 = vmatpush1.xpose.msra.mxu0 0.0
        %1301 = vmatprep.subr.mxu0 0.0
        %1302 = vmatpush1.xpose.msra.mxu0 0.0
        %1303 = vmatprep.subr.mxu0 0.0
        %1304 = vmatpush1.xpose.msra.mxu0 %v1271
        %1305 = vmatprep.subr.mxu0 0.0
        %1306 = vmatpush2.xpose.msra.mxu0 0.0
        %1307 = vmatprep.subr.mxu0 0.0
        %1308 = vmatpush2.xpose.msra.mxu0 0.0
        %1309 = vmatprep.subr.mxu0 0.0
        %1310 = vmatpush2.xpose.msra.mxu0 0.0
        %1311 = vmatprep.subr.mxu0 0.0
        %1312 = vmatpush2.xpose.msra.mxu0 0.0
        %1313 = vmatprep.subr.mxu0 0.0
        %1314 = vmatpush2.xpose.msra.mxu0 0.0
        %1315 = vmatprep.subr.mxu0 0.0
        %1316 = vmatpush2.xpose.msra.mxu0 0.0
        %1317 = vmatprep.subr.mxu0 0.0
        %1318 = vmatpush2.xpose.msra.mxu0 0.0
        %1319 = vmatprep.subr.mxu0 0.0
        %1320 = vmatpush2.xpose.msra.mxu0 0.0
        %1321 = vmatprep.subr.mxu0 0.0
        %1322 = vmatpush2.xpose.msra.mxu0 0.0
        %1323 = vmatprep.subr.mxu0 0.0
        %1324 = vmatpush2.xpose.msra.mxu0 0.0
        %1325 = vmatprep.subr.mxu0 0.0
        %1326 = vmatpush2.xpose.msra.mxu0 0.0
        %1327 = vmatprep.subr.mxu0 0.0
        %1328 = vmatpush2.xpose.msra.mxu0 0.0
        %1329 = vmatprep.subr.mxu0 0.0
        %1330 = vmatpush2.xpose.msra.mxu0 0.0
        %1331 = vmatprep.subr.mxu0 0.0
        %1332 = vmatpush2.xpose.msra.mxu0 0.0
        %1333 = vmatprep.subr.mxu0 0.0
        %1334 = vmatpush2.xpose.msra.mxu0 0.0
        %1335 = vmatprep.subr.mxu0 0.0
        %1336 = vmatpush2.xpose.msra.mxu0 0.0
        %1337 = vmatprep.mubr.f32.mxu0 0.0
        %1338 = vmatmul.mubr.f32.gmra.mxu0 %v1268
        %v1339 = vpop.f32.mrf.mxu0
        %v1340 = vadd.f32 %v1266, %v1339
        %v1341 = vpop.f32.mrf.mxu0
        %1342 = vdwg.mxu0
        %v1344 = vsel %vm762, %v1249, 0
        %1346 = vmatprep.subr.mxu0 0.0
        %1347 = vmatpush1.xpose.msra.mxu0 0.0
        %1348 = vmatprep.subr.mxu0 0.0
        %1349 = vmatpush1.xpose.msra.mxu0 0.0
        %1350 = vmatprep.subr.mxu0 0.0
        %1351 = vmatpush1.xpose.msra.mxu0 0.0
        %1352 = vmatprep.subr.mxu0 0.0
        %1353 = vmatpush1.xpose.msra.mxu0 0.0
        %1354 = vmatprep.subr.mxu0 0.0
        %1355 = vmatpush1.xpose.msra.mxu0 0.0
        %1356 = vmatprep.subr.mxu0 0.0
        %1357 = vmatpush1.xpose.msra.mxu0 0.0
        %1358 = vmatprep.subr.mxu0 0.0
        %1359 = vmatpush1.xpose.msra.mxu0 0.0
        %1360 = vmatprep.subr.mxu0 0.0
        %1361 = vmatpush1.xpose.msra.mxu0 0.0
        %1362 = vmatprep.subr.mxu0 0.0
        %1363 = vmatpush1.xpose.msra.mxu0 0.0
        %1364 = vmatprep.subr.mxu0 0.0
        %1365 = vmatpush1.xpose.msra.mxu0 0.0
        %1366 = vmatprep.subr.mxu0 0.0
        %1367 = vmatpush1.xpose.msra.mxu0 0.0
        %1368 = vmatprep.subr.mxu0 0.0
        %1369 = vmatpush1.xpose.msra.mxu0 0.0
        %1370 = vmatprep.subr.mxu0 0.0
        %1371 = vmatpush1.xpose.msra.mxu0 0.0
        %1372 = vmatprep.subr.mxu0 0.0
        %1373 = vmatpush1.xpose.msra.mxu0 0.0
        %1374 = vmatprep.subr.mxu0 0.0
        %1375 = vmatpush1.xpose.msra.mxu0 0.0
        %1376 = vmatprep.subr.mxu0 0.0
        %1377 = vmatpush1.xpose.msra.mxu0 %v1344
        %1378 = vmatprep.subr.mxu0 0.0
        %1379 = vmatpush2.xpose.msra.mxu0 0.0
        %1380 = vmatprep.subr.mxu0 0.0
        %1381 = vmatpush2.xpose.msra.mxu0 0.0
        %1382 = vmatprep.subr.mxu0 0.0
        %1383 = vmatpush2.xpose.msra.mxu0 0.0
        %1384 = vmatprep.subr.mxu0 0.0
        %1385 = vmatpush2.xpose.msra.mxu0 0.0
        %1386 = vmatprep.subr.mxu0 0.0
        %1387 = vmatpush2.xpose.msra.mxu0 0.0
        %1388 = vmatprep.subr.mxu0 0.0
        %1389 = vmatpush2.xpose.msra.mxu0 0.0
        %1390 = vmatprep.subr.mxu0 0.0
        %1391 = vmatpush2.xpose.msra.mxu0 0.0
        %1392 = vmatprep.subr.mxu0 0.0
        %1393 = vmatpush2.xpose.msra.mxu0 0.0
        %1394 = vmatprep.subr.mxu0 0.0
        %1395 = vmatpush2.xpose.msra.mxu0 0.0
        %1396 = vmatprep.subr.mxu0 0.0
        %1397 = vmatpush2.xpose.msra.mxu0 0.0
        %1398 = vmatprep.subr.mxu0 0.0
        %1399 = vmatpush2.xpose.msra.mxu0 0.0
        %1400 = vmatprep.subr.mxu0 0.0
        %1401 = vmatpush2.xpose.msra.mxu0 0.0
        %1402 = vmatprep.subr.mxu0 0.0
        %1403 = vmatpush2.xpose.msra.mxu0 0.0
        %1404 = vmatprep.subr.mxu0 0.0
        %1405 = vmatpush2.xpose.msra.mxu0 0.0
        %1406 = vmatprep.subr.mxu0 0.0
        %1407 = vmatpush2.xpose.msra.mxu0 0.0
        %1408 = vmatprep.subr.mxu0 0.0
        %1409 = vmatpush2.xpose.msra.mxu0 0.0
        %1410 = vmatprep.mubr.f32.mxu0 0.0
        %1411 = vmatmul.mubr.f32.gmra.mxu0 %v1268
        %v1412 = vpop.f32.mrf.mxu0
        %v1413 = vadd.f32 %v1266, %v1412
        %v1414 = vpop.f32.mrf.mxu0
        %1415 = vdwg.mxu0
        %v1417 = vsel %vm762, %v1250, 0
        %1419 = vmatprep.subr.mxu0 0.0
        %1420 = vmatpush1.xpose.msra.mxu0 0.0
        %1421 = vmatprep.subr.mxu0 0.0
        %1422 = vmatpush1.xpose.msra.mxu0 0.0
        %1423 = vmatprep.subr.mxu0 0.0
        %1424 = vmatpush1.xpose.msra.mxu0 0.0
        %1425 = vmatprep.subr.mxu0 0.0
        %1426 = vmatpush1.xpose.msra.mxu0 0.0
        %1427 = vmatprep.subr.mxu0 0.0
        %1428 = vmatpush1.xpose.msra.mxu0 0.0
        %1429 = vmatprep.subr.mxu0 0.0
        %1430 = vmatpush1.xpose.msra.mxu0 0.0
        %1431 = vmatprep.subr.mxu0 0.0
        %1432 = vmatpush1.xpose.msra.mxu0 0.0
        %1433 = vmatprep.subr.mxu0 0.0
        %1434 = vmatpush1.xpose.msra.mxu0 0.0
        %1435 = vmatprep.subr.mxu0 0.0
        %1436 = vmatpush1.xpose.msra.mxu0 0.0
        %1437 = vmatprep.subr.mxu0 0.0
        %1438 = vmatpush1.xpose.msra.mxu0 0.0
        %1439 = vmatprep.subr.mxu0 0.0
        %1440 = vmatpush1.xpose.msra.mxu0 0.0
        %1441 = vmatprep.subr.mxu0 0.0
        %1442 = vmatpush1.xpose.msra.mxu0 0.0
        %1443 = vmatprep.subr.mxu0 0.0
        %1444 = vmatpush1.xpose.msra.mxu0 0.0
        %1445 = vmatprep.subr.mxu0 0.0
        %1446 = vmatpush1.xpose.msra.mxu0 0.0
        %1447 = vmatprep.subr.mxu0 0.0
        %1448 = vmatpush1.xpose.msra.mxu0 0.0
        %1449 = vmatprep.subr.mxu0 0.0
        %1450 = vmatpush1.xpose.msra.mxu0 %v1417
        %1451 = vmatprep.subr.mxu0 0.0
        %1452 = vmatpush2.xpose.msra.mxu0 0.0
        %1453 = vmatprep.subr.mxu0 0.0
        %1454 = vmatpush2.xpose.msra.mxu0 0.0
        %1455 = vmatprep.subr.mxu0 0.0
        %1456 = vmatpush2.xpose.msra.mxu0 0.0
        %1457 = vmatprep.subr.mxu0 0.0
        %1458 = vmatpush2.xpose.msra.mxu0 0.0
        %1459 = vmatprep.subr.mxu0 0.0
        %1460 = vmatpush2.xpose.msra.mxu0 0.0
        %1461 = vmatprep.subr.mxu0 0.0
        %1462 = vmatpush2.xpose.msra.mxu0 0.0
        %1463 = vmatprep.subr.mxu0 0.0
        %1464 = vmatpush2.xpose.msra.mxu0 0.0
        %1465 = vmatprep.subr.mxu0 0.0
        %1466 = vmatpush2.xpose.msra.mxu0 0.0
        %1467 = vmatprep.subr.mxu0 0.0
        %1468 = vmatpush2.xpose.msra.mxu0 0.0
        %1469 = vmatprep.subr.mxu0 0.0
        %1470 = vmatpush2.xpose.msra.mxu0 0.0
        %1471 = vmatprep.subr.mxu0 0.0
        %1472 = vmatpush2.xpose.msra.mxu0 0.0
        %1473 = vmatprep.subr.mxu0 0.0
        %1474 = vmatpush2.xpose.msra.mxu0 0.0
        %1475 = vmatprep.subr.mxu0 0.0
        %1476 = vmatpush2.xpose.msra.mxu0 0.0
        %1477 = vmatprep.subr.mxu0 0.0
        %1478 = vmatpush2.xpose.msra.mxu0 0.0
        %1479 = vmatprep.subr.mxu0 0.0
        %1480 = vmatpush2.xpose.msra.mxu0 0.0
        %1481 = vmatprep.subr.mxu0 0.0
        %1482 = vmatpush2.xpose.msra.mxu0 0.0
        %1483 = vmatprep.mubr.f32.mxu0 0.0
        %1484 = vmatmul.mubr.f32.gmra.mxu0 %v1268
        %v1485 = vpop.f32.mrf.mxu0
        %v1486 = vadd.f32 %v1266, %v1485
        %v1487 = vpop.f32.mrf.mxu0
        %1488 = vdwg.mxu0
        %v1490 = vsel %vm762, %v1251, 0
        %1492 = vmatprep.subr.mxu0 0.0
        %1493 = vmatpush1.xpose.msra.mxu0 0.0
        %1494 = vmatprep.subr.mxu0 0.0
        %1495 = vmatpush1.xpose.msra.mxu0 0.0
        %1496 = vmatprep.subr.mxu0 0.0
        %1497 = vmatpush1.xpose.msra.mxu0 0.0
        %1498 = vmatprep.subr.mxu0 0.0
        %1499 = vmatpush1.xpose.msra.mxu0 0.0
        %1500 = vmatprep.subr.mxu0 0.0
        %1501 = vmatpush1.xpose.msra.mxu0 0.0
        %1502 = vmatprep.subr.mxu0 0.0
        %1503 = vmatpush1.xpose.msra.mxu0 0.0
        %1504 = vmatprep.subr.mxu0 0.0
        %1505 = vmatpush1.xpose.msra.mxu0 0.0
        %1506 = vmatprep.subr.mxu0 0.0
        %1507 = vmatpush1.xpose.msra.mxu0 0.0
        %1508 = vmatprep.subr.mxu0 0.0
        %1509 = vmatpush1.xpose.msra.mxu0 0.0
        %1510 = vmatprep.subr.mxu0 0.0
        %1511 = vmatpush1.xpose.msra.mxu0 0.0
        %1512 = vmatprep.subr.mxu0 0.0
        %1513 = vmatpush1.xpose.msra.mxu0 0.0
        %1514 = vmatprep.subr.mxu0 0.0
        %1515 = vmatpush1.xpose.msra.mxu0 0.0
        %1516 = vmatprep.subr.mxu0 0.0
        %1517 = vmatpush1.xpose.msra.mxu0 0.0
        %1518 = vmatprep.subr.mxu0 0.0
        %1519 = vmatpush1.xpose.msra.mxu0 0.0
        %1520 = vmatprep.subr.mxu0 0.0
        %1521 = vmatpush1.xpose.msra.mxu0 0.0
        %1522 = vmatprep.subr.mxu0 0.0
        %1523 = vmatpush1.xpose.msra.mxu0 %v1490
        %1524 = vmatprep.subr.mxu0 0.0
        %1525 = vmatpush2.xpose.msra.mxu0 0.0
        %1526 = vmatprep.subr.mxu0 0.0
        %1527 = vmatpush2.xpose.msra.mxu0 0.0
        %1528 = vmatprep.subr.mxu0 0.0
        %1529 = vmatpush2.xpose.msra.mxu0 0.0
        %1530 = vmatprep.subr.mxu0 0.0
        %1531 = vmatpush2.xpose.msra.mxu0 0.0
        %1532 = vmatprep.subr.mxu0 0.0
        %1533 = vmatpush2.xpose.msra.mxu0 0.0
        %1534 = vmatprep.subr.mxu0 0.0
        %1535 = vmatpush2.xpose.msra.mxu0 0.0
        %1536 = vmatprep.subr.mxu0 0.0
        %1537 = vmatpush2.xpose.msra.mxu0 0.0
        %1538 = vmatprep.subr.mxu0 0.0
        %1539 = vmatpush2.xpose.msra.mxu0 0.0
        %1540 = vmatprep.subr.mxu0 0.0
        %1541 = vmatpush2.xpose.msra.mxu0 0.0
        %1542 = vmatprep.subr.mxu0 0.0
        %1543 = vmatpush2.xpose.msra.mxu0 0.0
        %1544 = vmatprep.subr.mxu0 0.0
        %1545 = vmatpush2.xpose.msra.mxu0 0.0
        %1546 = vmatprep.subr.mxu0 0.0
        %1547 = vmatpush2.xpose.msra.mxu0 0.0
        %1548 = vmatprep.subr.mxu0 0.0
        %1549 = vmatpush2.xpose.msra.mxu0 0.0
        %1550 = vmatprep.subr.mxu0 0.0
        %1551 = vmatpush2.xpose.msra.mxu0 0.0
        %1552 = vmatprep.subr.mxu0 0.0
        %1553 = vmatpush2.xpose.msra.mxu0 0.0
        %1554 = vmatprep.subr.mxu0 0.0
        %1555 = vmatpush2.xpose.msra.mxu0 0.0
        %1556 = vmatprep.mubr.f32.mxu0 0.0
        %1557 = vmatmul.mubr.f32.gmra.mxu0 %v1268
        %v1558 = vpop.f32.mrf.mxu0
        %v1559 = vadd.f32 %v1266, %v1558
        %v1560 = vpop.f32.mrf.mxu0
        %1561 = vdwg.mxu0
        %v1563 = vsel %vm762, %v1252, 0
        %1565 = vmatprep.subr.mxu0 0.0
        %1566 = vmatpush1.xpose.msra.mxu0 0.0
        %1567 = vmatprep.subr.mxu0 0.0
        %1568 = vmatpush1.xpose.msra.mxu0 0.0
        %1569 = vmatprep.subr.mxu0 0.0
        %1570 = vmatpush1.xpose.msra.mxu0 0.0
        %1571 = vmatprep.subr.mxu0 0.0
        %1572 = vmatpush1.xpose.msra.mxu0 0.0
        %1573 = vmatprep.subr.mxu0 0.0
        %1574 = vmatpush1.xpose.msra.mxu0 0.0
        %1575 = vmatprep.subr.mxu0 0.0
        %1576 = vmatpush1.xpose.msra.mxu0 0.0
        %1577 = vmatprep.subr.mxu0 0.0
        %1578 = vmatpush1.xpose.msra.mxu0 0.0
        %1579 = vmatprep.subr.mxu0 0.0
        %1580 = vmatpush1.xpose.msra.mxu0 0.0
        %1581 = vmatprep.subr.mxu0 0.0
        %1582 = vmatpush1.xpose.msra.mxu0 0.0
        %1583 = vmatprep.subr.mxu0 0.0
        %1584 = vmatpush1.xpose.msra.mxu0 0.0
        %1585 = vmatprep.subr.mxu0 0.0
        %1586 = vmatpush1.xpose.msra.mxu0 0.0
        %1587 = vmatprep.subr.mxu0 0.0
        %1588 = vmatpush1.xpose.msra.mxu0 0.0
        %1589 = vmatprep.subr.mxu0 0.0
        %1590 = vmatpush1.xpose.msra.mxu0 0.0
        %1591 = vmatprep.subr.mxu0 0.0
        %1592 = vmatpush1.xpose.msra.mxu0 0.0
        %1593 = vmatprep.subr.mxu0 0.0
        %1594 = vmatpush1.xpose.msra.mxu0 0.0
        %1595 = vmatprep.subr.mxu0 0.0
        %1596 = vmatpush1.xpose.msra.mxu0 %v1563
        %1597 = vmatprep.subr.mxu0 0.0
        %1598 = vmatpush2.xpose.msra.mxu0 0.0
        %1599 = vmatprep.subr.mxu0 0.0
        %1600 = vmatpush2.xpose.msra.mxu0 0.0
        %1601 = vmatprep.subr.mxu0 0.0
        %1602 = vmatpush2.xpose.msra.mxu0 0.0
        %1603 = vmatprep.subr.mxu0 0.0
        %1604 = vmatpush2.xpose.msra.mxu0 0.0
        %1605 = vmatprep.subr.mxu0 0.0
        %1606 = vmatpush2.xpose.msra.mxu0 0.0
        %1607 = vmatprep.subr.mxu0 0.0
        %1608 = vmatpush2.xpose.msra.mxu0 0.0
        %1609 = vmatprep.subr.mxu0 0.0
        %1610 = vmatpush2.xpose.msra.mxu0 0.0
        %1611 = vmatprep.subr.mxu0 0.0
        %1612 = vmatpush2.xpose.msra.mxu0 0.0
        %1613 = vmatprep.subr.mxu0 0.0
        %1614 = vmatpush2.xpose.msra.mxu0 0.0
        %1615 = vmatprep.subr.mxu0 0.0
        %1616 = vmatpush2.xpose.msra.mxu0 0.0
        %1617 = vmatprep.subr.mxu0 0.0
        %1618 = vmatpush2.xpose.msra.mxu0 0.0
        %1619 = vmatprep.subr.mxu0 0.0
        %1620 = vmatpush2.xpose.msra.mxu0 0.0
        %1621 = vmatprep.subr.mxu0 0.0
        %1622 = vmatpush2.xpose.msra.mxu0 0.0
        %1623 = vmatprep.subr.mxu0 0.0
        %1624 = vmatpush2.xpose.msra.mxu0 0.0
        %1625 = vmatprep.subr.mxu0 0.0
        %1626 = vmatpush2.xpose.msra.mxu0 0.0
        %1627 = vmatprep.subr.mxu0 0.0
        %1628 = vmatpush2.xpose.msra.mxu0 0.0
        %1629 = vmatprep.mubr.f32.mxu0 0.0
        %1630 = vmatmul.mubr.f32.gmra.mxu0 %v1268
        %v1631 = vpop.f32.mrf.mxu0
        %v1632 = vadd.f32 %v1266, %v1631
        %v1633 = vpop.f32.mrf.mxu0
        %1634 = vdwg.mxu0
        %v1636 = vsel %vm762, %v1253, 0
        %1638 = vmatprep.subr.mxu0 0.0
        %1639 = vmatpush1.xpose.msra.mxu0 0.0
        %1640 = vmatprep.subr.mxu0 0.0
        %1641 = vmatpush1.xpose.msra.mxu0 0.0
        %1642 = vmatprep.subr.mxu0 0.0
        %1643 = vmatpush1.xpose.msra.mxu0 0.0
        %1644 = vmatprep.subr.mxu0 0.0
        %1645 = vmatpush1.xpose.msra.mxu0 0.0
        %1646 = vmatprep.subr.mxu0 0.0
        %1647 = vmatpush1.xpose.msra.mxu0 0.0
        %1648 = vmatprep.subr.mxu0 0.0
        %1649 = vmatpush1.xpose.msra.mxu0 0.0
        %1650 = vmatprep.subr.mxu0 0.0
        %1651 = vmatpush1.xpose.msra.mxu0 0.0
        %1652 = vmatprep.subr.mxu0 0.0
        %1653 = vmatpush1.xpose.msra.mxu0 0.0
        %1654 = vmatprep.subr.mxu0 0.0
        %1655 = vmatpush1.xpose.msra.mxu0 0.0
        %1656 = vmatprep.subr.mxu0 0.0
        %1657 = vmatpush1.xpose.msra.mxu0 0.0
        %1658 = vmatprep.subr.mxu0 0.0
        %1659 = vmatpush1.xpose.msra.mxu0 0.0
        %1660 = vmatprep.subr.mxu0 0.0
        %1661 = vmatpush1.xpose.msra.mxu0 0.0
        %1662 = vmatprep.subr.mxu0 0.0
        %1663 = vmatpush1.xpose.msra.mxu0 0.0
        %1664 = vmatprep.subr.mxu0 0.0
        %1665 = vmatpush1.xpose.msra.mxu0 0.0
        %1666 = vmatprep.subr.mxu0 0.0
        %1667 = vmatpush1.xpose.msra.mxu0 0.0
        %1668 = vmatprep.subr.mxu0 0.0
        %1669 = vmatpush1.xpose.msra.mxu0 %v1636
        %1670 = vmatprep.subr.mxu0 0.0
        %1671 = vmatpush2.xpose.msra.mxu0 0.0
        %1672 = vmatprep.subr.mxu0 0.0
        %1673 = vmatpush2.xpose.msra.mxu0 0.0
        %1674 = vmatprep.subr.mxu0 0.0
        %1675 = vmatpush2.xpose.msra.mxu0 0.0
        %1676 = vmatprep.subr.mxu0 0.0
        %1677 = vmatpush2.xpose.msra.mxu0 0.0
        %1678 = vmatprep.subr.mxu0 0.0
        %1679 = vmatpush2.xpose.msra.mxu0 0.0
        %1680 = vmatprep.subr.mxu0 0.0
        %1681 = vmatpush2.xpose.msra.mxu0 0.0
        %1682 = vmatprep.subr.mxu0 0.0
        %1683 = vmatpush2.xpose.msra.mxu0 0.0
        %1684 = vmatprep.subr.mxu0 0.0
        %1685 = vmatpush2.xpose.msra.mxu0 0.0
        %1686 = vmatprep.subr.mxu0 0.0
        %1687 = vmatpush2.xpose.msra.mxu0 0.0
        %1688 = vmatprep.subr.mxu0 0.0
        %1689 = vmatpush2.xpose.msra.mxu0 0.0
        %1690 = vmatprep.subr.mxu0 0.0
        %1691 = vmatpush2.xpose.msra.mxu0 0.0
        %1692 = vmatprep.subr.mxu0 0.0
        %1693 = vmatpush2.xpose.msra.mxu0 0.0
        %1694 = vmatprep.subr.mxu0 0.0
        %1695 = vmatpush2.xpose.msra.mxu0 0.0
        %1696 = vmatprep.subr.mxu0 0.0
        %1697 = vmatpush2.xpose.msra.mxu0 0.0
        %1698 = vmatprep.subr.mxu0 0.0
        %1699 = vmatpush2.xpose.msra.mxu0 0.0
        %1700 = vmatprep.subr.mxu0 0.0
        %1701 = vmatpush2.xpose.msra.mxu0 0.0
        %1702 = vmatprep.mubr.f32.mxu0 0.0
        %1703 = vmatmul.mubr.f32.gmra.mxu0 %v1268
        %v1704 = vpop.f32.mrf.mxu0
        %v1705 = vadd.f32 %v1266, %v1704
        %v1706 = vpop.f32.mrf.mxu0
        %1707 = vdwg.mxu0
        %v1709 = vsel %vm762, %v1254, 0
        %1711 = vmatprep.subr.mxu0 0.0
        %1712 = vmatpush1.xpose.msra.mxu0 0.0
        %1713 = vmatprep.subr.mxu0 0.0
        %1714 = vmatpush1.xpose.msra.mxu0 0.0
        %1715 = vmatprep.subr.mxu0 0.0
        %1716 = vmatpush1.xpose.msra.mxu0 0.0
        %1717 = vmatprep.subr.mxu0 0.0
        %1718 = vmatpush1.xpose.msra.mxu0 0.0
        %1719 = vmatprep.subr.mxu0 0.0
        %1720 = vmatpush1.xpose.msra.mxu0 0.0
        %1721 = vmatprep.subr.mxu0 0.0
        %1722 = vmatpush1.xpose.msra.mxu0 0.0
        %1723 = vmatprep.subr.mxu0 0.0
        %1724 = vmatpush1.xpose.msra.mxu0 0.0
        %1725 = vmatprep.subr.mxu0 0.0
        %1726 = vmatpush1.xpose.msra.mxu0 0.0
        %1727 = vmatprep.subr.mxu0 0.0
        %1728 = vmatpush1.xpose.msra.mxu0 0.0
        %1729 = vmatprep.subr.mxu0 0.0
        %1730 = vmatpush1.xpose.msra.mxu0 0.0
        %1731 = vmatprep.subr.mxu0 0.0
        %1732 = vmatpush1.xpose.msra.mxu0 0.0
        %1733 = vmatprep.subr.mxu0 0.0
        %1734 = vmatpush1.xpose.msra.mxu0 0.0
        %1735 = vmatprep.subr.mxu0 0.0
        %1736 = vmatpush1.xpose.msra.mxu0 0.0
        %1737 = vmatprep.subr.mxu0 0.0
        %1738 = vmatpush1.xpose.msra.mxu0 0.0
        %1739 = vmatprep.subr.mxu0 0.0
        %1740 = vmatpush1.xpose.msra.mxu0 0.0
        %1741 = vmatprep.subr.mxu0 0.0
        %1742 = vmatpush1.xpose.msra.mxu0 %v1709
        %1743 = vmatprep.subr.mxu0 0.0
        %1744 = vmatpush2.xpose.msra.mxu0 0.0
        %1745 = vmatprep.subr.mxu0 0.0
        %1746 = vmatpush2.xpose.msra.mxu0 0.0
        %1747 = vmatprep.subr.mxu0 0.0
        %1748 = vmatpush2.xpose.msra.mxu0 0.0
        %1749 = vmatprep.subr.mxu0 0.0
        %1750 = vmatpush2.xpose.msra.mxu0 0.0
        %1751 = vmatprep.subr.mxu0 0.0
        %1752 = vmatpush2.xpose.msra.mxu0 0.0
        %1753 = vmatprep.subr.mxu0 0.0
        %1754 = vmatpush2.xpose.msra.mxu0 0.0
        %1755 = vmatprep.subr.mxu0 0.0
        %1756 = vmatpush2.xpose.msra.mxu0 0.0
        %1757 = vmatprep.subr.mxu0 0.0
        %1758 = vmatpush2.xpose.msra.mxu0 0.0
        %1759 = vmatprep.subr.mxu0 0.0
        %1760 = vmatpush2.xpose.msra.mxu0 0.0
        %1761 = vmatprep.subr.mxu0 0.0
        %1762 = vmatpush2.xpose.msra.mxu0 0.0
        %1763 = vmatprep.subr.mxu0 0.0
        %1764 = vmatpush2.xpose.msra.mxu0 0.0
        %1765 = vmatprep.subr.mxu0 0.0
        %1766 = vmatpush2.xpose.msra.mxu0 0.0
        %1767 = vmatprep.subr.mxu0 0.0
        %1768 = vmatpush2.xpose.msra.mxu0 0.0
        %1769 = vmatprep.subr.mxu0 0.0
        %1770 = vmatpush2.xpose.msra.mxu0 0.0
        %1771 = vmatprep.subr.mxu0 0.0
        %1772 = vmatpush2.xpose.msra.mxu0 0.0
        %1773 = vmatprep.subr.mxu0 0.0
        %1774 = vmatpush2.xpose.msra.mxu0 0.0
        %1775 = vmatprep.mubr.f32.mxu0 0.0
        %1776 = vmatmul.mubr.f32.gmra.mxu0 %v1268
        %v1777 = vpop.f32.mrf.mxu0
        %v1778 = vadd.f32 %v1266, %v1777
        %v1779 = vpop.f32.mrf.mxu0
        %1780 = vdwg.mxu0
        %v1782 = vsel %vm762, %v1255, 0
        %1784 = vmatprep.subr.mxu0 0.0
        %1785 = vmatpush1.xpose.msra.mxu0 0.0
        %1786 = vmatprep.subr.mxu0 0.0
        %1787 = vmatpush1.xpose.msra.mxu0 0.0
        %1788 = vmatprep.subr.mxu0 0.0
        %1789 = vmatpush1.xpose.msra.mxu0 0.0
        %1790 = vmatprep.subr.mxu0 0.0
        %1791 = vmatpush1.xpose.msra.mxu0 0.0
        %1792 = vmatprep.subr.mxu0 0.0
        %1793 = vmatpush1.xpose.msra.mxu0 0.0
        %1794 = vmatprep.subr.mxu0 0.0
        %1795 = vmatpush1.xpose.msra.mxu0 0.0
        %1796 = vmatprep.subr.mxu0 0.0
        %1797 = vmatpush1.xpose.msra.mxu0 0.0
        %1798 = vmatprep.subr.mxu0 0.0
        %1799 = vmatpush1.xpose.msra.mxu0 0.0
        %1800 = vmatprep.subr.mxu0 0.0
        %1801 = vmatpush1.xpose.msra.mxu0 0.0
        %1802 = vmatprep.subr.mxu0 0.0
        %1803 = vmatpush1.xpose.msra.mxu0 0.0
        %1804 = vmatprep.subr.mxu0 0.0
        %1805 = vmatpush1.xpose.msra.mxu0 0.0
        %1806 = vmatprep.subr.mxu0 0.0
        %1807 = vmatpush1.xpose.msra.mxu0 0.0
        %1808 = vmatprep.subr.mxu0 0.0
        %1809 = vmatpush1.xpose.msra.mxu0 0.0
        %1810 = vmatprep.subr.mxu0 0.0
        %1811 = vmatpush1.xpose.msra.mxu0 0.0
        %1812 = vmatprep.subr.mxu0 0.0
        %1813 = vmatpush1.xpose.msra.mxu0 0.0
        %1814 = vmatprep.subr.mxu0 0.0
        %1815 = vmatpush1.xpose.msra.mxu0 %v1782
        %1816 = vmatprep.subr.mxu0 0.0
        %1817 = vmatpush2.xpose.msra.mxu0 0.0
        %1818 = vmatprep.subr.mxu0 0.0
        %1819 = vmatpush2.xpose.msra.mxu0 0.0
        %1820 = vmatprep.subr.mxu0 0.0
        %1821 = vmatpush2.xpose.msra.mxu0 0.0
        %1822 = vmatprep.subr.mxu0 0.0
        %1823 = vmatpush2.xpose.msra.mxu0 0.0
        %1824 = vmatprep.subr.mxu0 0.0
        %1825 = vmatpush2.xpose.msra.mxu0 0.0
        %1826 = vmatprep.subr.mxu0 0.0
        %1827 = vmatpush2.xpose.msra.mxu0 0.0
        %1828 = vmatprep.subr.mxu0 0.0
        %1829 = vmatpush2.xpose.msra.mxu0 0.0
        %1830 = vmatprep.subr.mxu0 0.0
        %1831 = vmatpush2.xpose.msra.mxu0 0.0
        %1832 = vmatprep.subr.mxu0 0.0
        %1833 = vmatpush2.xpose.msra.mxu0 0.0
        %1834 = vmatprep.subr.mxu0 0.0
        %1835 = vmatpush2.xpose.msra.mxu0 0.0
        %1836 = vmatprep.subr.mxu0 0.0
        %1837 = vmatpush2.xpose.msra.mxu0 0.0
        %1838 = vmatprep.subr.mxu0 0.0
        %1839 = vmatpush2.xpose.msra.mxu0 0.0
        %1840 = vmatprep.subr.mxu0 0.0
        %1841 = vmatpush2.xpose.msra.mxu0 0.0
        %1842 = vmatprep.subr.mxu0 0.0
        %1843 = vmatpush2.xpose.msra.mxu0 0.0
        %1844 = vmatprep.subr.mxu0 0.0
        %1845 = vmatpush2.xpose.msra.mxu0 0.0
        %1846 = vmatprep.subr.mxu0 0.0
        %1847 = vmatpush2.xpose.msra.mxu0 0.0
        %1848 = vmatprep.mubr.f32.mxu0 0.0
        %1849 = vmatmul.mubr.f32.gmra.mxu0 %v1268
        %v1850 = vpop.f32.mrf.mxu0
        %v1851 = vadd.f32 %v1266, %v1850
        %v1852 = vpop.f32.mrf.mxu0
        %1853 = vdwg.mxu0
        %v1854 = vmul.f32 %v1340, 1.442695
        %v1855 = vpow.pop %v1854
        %v1856 = vmul.f32 %v1413, 1.442695
        %v1857 = vpow.pop %v1856
        %v1858 = vmul.f32 %v1486, 1.442695
        %v1859 = vpow.pop %v1858
        %v1860 = vmul.f32 %v1559, 1.442695
        %v1861 = vpow.pop %v1860
        %v1862 = vmul.f32 %v1632, 1.442695
        %v1863 = vpow.pop %v1862
        %v1864 = vmul.f32 %v1705, 1.442695
        %v1865 = vpow.pop %v1864
        %v1866 = vmul.f32 %v1778, 1.442695
        %v1867 = vpow.pop %v1866
        %v1868 = vmul.f32 %v1851, 1.442695
        %v1869 = vpow.pop %v1868
        %v1870 = vld [vmem:[%s582] sm:$0x1]
        %v1871 = vld [vmem:[%s582 + $0x1] sm:$0x1]
        %v1872 = vld [vmem:[%s582 + $0x2] sm:$0x1]
        %v1873 = vld [vmem:[%s582 + $0x3] sm:$0x1]
        %v1874 = vld [vmem:[%s582 + $0x4] sm:$0x1]
        %v1875 = vld [vmem:[%s582 + $0x5] sm:$0x1]
        %v1876 = vld [vmem:[%s582 + $0x6] sm:$0x1]
        %v1877 = vld [vmem:[%s582 + $0x7] sm:$0x1]
        %v1878 = vmul.f32 %v1855, %v1870
        %v1879 = vmul.f32 %v1857, %v1871
        %v1880 = vmul.f32 %v1859, %v1872
        %v1881 = vmul.f32 %v1861, %v1873
        %v1882 = vmul.f32 %v1863, %v1874
        %v1883 = vmul.f32 %v1865, %v1875
        %v1884 = vmul.f32 %v1867, %v1876
        %v1885 = vmul.f32 %v1869, %v1877
        %vm1886 = vcmask 57344
        %v1887 = vsel %vm1886, %v1878, 0.0
        %1888 = vadd.xlane.f32.xlu0 %v1887
        %v1889 = vpop.xlane.xlu0 %1888
        %v1890 = vsel %vm1886, %v1879, 0.0
        %1891 = vadd.xlane.f32.xlu0 %v1890
        %v1892 = vpop.xlane.xlu0 %1891
        %v1893 = vsel %vm1886, %v1880, 0.0
        %1894 = vadd.xlane.f32.xlu0 %v1893
        %v1895 = vpop.xlane.xlu0 %1894
        %v1896 = vsel %vm1886, %v1881, 0.0
        %1897 = vadd.xlane.f32.xlu0 %v1896
        %v1898 = vpop.xlane.xlu0 %1897
        %v1899 = vsel %vm1886, %v1882, 0.0
        %1900 = vadd.xlane.f32.xlu0 %v1899
        %v1901 = vpop.xlane.xlu0 %1900
        %v1902 = vsel %vm1886, %v1883, 0.0
        %1903 = vadd.xlane.f32.xlu0 %v1902
        %v1904 = vpop.xlane.xlu0 %1903
        %v1905 = vsel %vm1886, %v1884, 0.0
        %1906 = vadd.xlane.f32.xlu0 %v1905
        %v1907 = vpop.xlane.xlu0 %1906
        %v1908 = vsel %vm1886, %v1885, 0.0
        %1909 = vadd.xlane.f32.xlu0 %v1908
        %v1910 = vpop.xlane.xlu0 %1909
        %v1911 = vadd.f32 %v1889, 1e-10
        %v1912 = vadd.f32 %v1892, 1e-10
        %v1913 = vadd.f32 %v1895, 1e-10
        %v1914 = vadd.f32 %v1898, 1e-10
        %v1915 = vadd.f32 %v1901, 1e-10
        %v1916 = vadd.f32 %v1904, 1e-10
        %v1917 = vadd.f32 %v1907, 1e-10
        %v1918 = vadd.f32 %v1910, 1e-10
        %v1919 = vrcp.pop %v1911
        %v1920 = vrcp.pop %v1912
        %v1921 = vrcp.pop %v1913
        %v1922 = vrcp.pop %v1914
        %v1923 = vrcp.pop %v1915
        %v1924 = vrcp.pop %v1916
        %v1925 = vrcp.pop %v1917
        %v1926 = vrcp.pop %v1918
        %v1927 = vmul.f32 %v1878, %v1919
        %v1928 = vmul.f32 %v1879, %v1920
        %v1929 = vmul.f32 %v1880, %v1921
        %v1930 = vmul.f32 %v1881, %v1922
        %v1931 = vmul.f32 %v1882, %v1923
        %v1932 = vmul.f32 %v1883, %v1924
        %v1933 = vmul.f32 %v1884, %v1925
        %v1934 = vmul.f32 %v1885, %v1926
        %vm1935 = vcmask 64512
        %v1937 = vsel %vm1935, %v1927, 0
        %1939 = vmatprep.subr.mxu0 0.0
        %1940 = vmatpush1.msra.mxu0 0.0
        %1941 = vmatprep.subr.mxu0 0.0
        %1942 = vmatpush1.msra.mxu0 0.0
        %1943 = vmatprep.subr.mxu0 0.0
        %1944 = vmatpush1.msra.mxu0 0.0
        %1945 = vmatprep.subr.mxu0 0.0
        %1946 = vmatpush1.msra.mxu0 0.0
        %1947 = vmatprep.subr.mxu0 0.0
        %1948 = vmatpush1.msra.mxu0 0.0
        %1949 = vmatprep.subr.mxu0 0.0
        %1950 = vmatpush1.msra.mxu0 0.0
        %1951 = vmatprep.subr.mxu0 0.0
        %1952 = vmatpush1.msra.mxu0 0.0
        %1953 = vmatprep.subr.mxu0 0.0
        %1954 = vmatpush1.msra.mxu0 0.0
        %1955 = vmatprep.subr.mxu0 0.0
        %1956 = vmatpush1.msra.mxu0 0.0
        %1957 = vmatprep.subr.mxu0 0.0
        %1958 = vmatpush1.msra.mxu0 0.0
        %1959 = vmatprep.subr.mxu0 0.0
        %1960 = vmatpush1.msra.mxu0 0.0
        %1961 = vmatprep.subr.mxu0 0.0
        %1962 = vmatpush1.msra.mxu0 0.0
        %1963 = vmatprep.subr.mxu0 0.0
        %1964 = vmatpush1.msra.mxu0 0.0
        %1965 = vmatprep.subr.mxu0 0.0
        %1966 = vmatpush1.msra.mxu0 0.0
        %1967 = vmatprep.subr.mxu0 0.0
        %1968 = vmatpush1.msra.mxu0 0.0
        %1969 = vmatprep.subr.mxu0 0.0
        %1970 = vmatpush1.msra.mxu0 %v854
        %1971 = vmatprep.subr.mxu0 0.0
        %1972 = vmatpush2.msra.mxu0 0.0
        %1973 = vmatprep.subr.mxu0 0.0
        %1974 = vmatpush2.msra.mxu0 0.0
        %1975 = vmatprep.subr.mxu0 0.0
        %1976 = vmatpush2.msra.mxu0 0.0
        %1977 = vmatprep.subr.mxu0 0.0
        %1978 = vmatpush2.msra.mxu0 0.0
        %1979 = vmatprep.subr.mxu0 0.0
        %1980 = vmatpush2.msra.mxu0 0.0
        %1981 = vmatprep.subr.mxu0 0.0
        %1982 = vmatpush2.msra.mxu0 0.0
        %1983 = vmatprep.subr.mxu0 0.0
        %1984 = vmatpush2.msra.mxu0 0.0
        %1985 = vmatprep.subr.mxu0 0.0
        %1986 = vmatpush2.msra.mxu0 0.0
        %1987 = vmatprep.subr.mxu0 0.0
        %1988 = vmatpush2.msra.mxu0 0.0
        %1989 = vmatprep.subr.mxu0 0.0
        %1990 = vmatpush2.msra.mxu0 0.0
        %1991 = vmatprep.subr.mxu0 0.0
        %1992 = vmatpush2.msra.mxu0 0.0
        %1993 = vmatprep.subr.mxu0 0.0
        %1994 = vmatpush2.msra.mxu0 0.0
        %1995 = vmatprep.subr.mxu0 0.0
        %1996 = vmatpush2.msra.mxu0 0.0
        %1997 = vmatprep.subr.mxu0 0.0
        %1998 = vmatpush2.msra.mxu0 0.0
        %1999 = vmatprep.subr.mxu0 0.0
        %2000 = vmatpush2.msra.mxu0 0.0
        %2001 = vmatprep.subr.mxu0 0.0
        %2002 = vmatpush2.msra.mxu0 0.0
        %2003 = vmatprep.mubr.f32.mxu0 0.0
        %2004 = vmatmul.mubr.f32.gmra.mxu0 %v1937
        %v2005 = vpop.f32.mrf.mxu0
        %v2006 = vadd.f32 0.0, %v2005
        %v2007 = vpop.f32.mrf.mxu0
        %2008 = vdwg.mxu0
        %v2010 = vsel %vm1935, %v1928, 0
        %2012 = vmatprep.subr.mxu0 0.0
        %2013 = vmatpush1.msra.mxu0 0.0
        %2014 = vmatprep.subr.mxu0 0.0
        %2015 = vmatpush1.msra.mxu0 0.0
        %2016 = vmatprep.subr.mxu0 0.0
        %2017 = vmatpush1.msra.mxu0 0.0
        %2018 = vmatprep.subr.mxu0 0.0
        %2019 = vmatpush1.msra.mxu0 0.0
        %2020 = vmatprep.subr.mxu0 0.0
        %2021 = vmatpush1.msra.mxu0 0.0
        %2022 = vmatprep.subr.mxu0 0.0
        %2023 = vmatpush1.msra.mxu0 0.0
        %2024 = vmatprep.subr.mxu0 0.0
        %2025 = vmatpush1.msra.mxu0 0.0
        %2026 = vmatprep.subr.mxu0 0.0
        %2027 = vmatpush1.msra.mxu0 0.0
        %2028 = vmatprep.subr.mxu0 0.0
        %2029 = vmatpush1.msra.mxu0 0.0
        %2030 = vmatprep.subr.mxu0 0.0
        %2031 = vmatpush1.msra.mxu0 0.0
        %2032 = vmatprep.subr.mxu0 0.0
        %2033 = vmatpush1.msra.mxu0 0.0
        %2034 = vmatprep.subr.mxu0 0.0
        %2035 = vmatpush1.msra.mxu0 0.0
        %2036 = vmatprep.subr.mxu0 0.0
        %2037 = vmatpush1.msra.mxu0 0.0
        %2038 = vmatprep.subr.mxu0 0.0
        %2039 = vmatpush1.msra.mxu0 0.0
        %2040 = vmatprep.subr.mxu0 0.0
        %2041 = vmatpush1.msra.mxu0 0.0
        %2042 = vmatprep.subr.mxu0 0.0
        %2043 = vmatpush1.msra.mxu0 %v859
        %2044 = vmatprep.subr.mxu0 0.0
        %2045 = vmatpush2.msra.mxu0 0.0
        %2046 = vmatprep.subr.mxu0 0.0
        %2047 = vmatpush2.msra.mxu0 0.0
        %2048 = vmatprep.subr.mxu0 0.0
        %2049 = vmatpush2.msra.mxu0 0.0
        %2050 = vmatprep.subr.mxu0 0.0
        %2051 = vmatpush2.msra.mxu0 0.0
        %2052 = vmatprep.subr.mxu0 0.0
        %2053 = vmatpush2.msra.mxu0 0.0
        %2054 = vmatprep.subr.mxu0 0.0
        %2055 = vmatpush2.msra.mxu0 0.0
        %2056 = vmatprep.subr.mxu0 0.0
        %2057 = vmatpush2.msra.mxu0 0.0
        %2058 = vmatprep.subr.mxu0 0.0
        %2059 = vmatpush2.msra.mxu0 0.0
        %2060 = vmatprep.subr.mxu0 0.0
        %2061 = vmatpush2.msra.mxu0 0.0
        %2062 = vmatprep.subr.mxu0 0.0
        %2063 = vmatpush2.msra.mxu0 0.0
        %2064 = vmatprep.subr.mxu0 0.0
        %2065 = vmatpush2.msra.mxu0 0.0
        %2066 = vmatprep.subr.mxu0 0.0
        %2067 = vmatpush2.msra.mxu0 0.0
        %2068 = vmatprep.subr.mxu0 0.0
        %2069 = vmatpush2.msra.mxu0 0.0
        %2070 = vmatprep.subr.mxu0 0.0
        %2071 = vmatpush2.msra.mxu0 0.0
        %2072 = vmatprep.subr.mxu0 0.0
        %2073 = vmatpush2.msra.mxu0 0.0
        %2074 = vmatprep.subr.mxu0 0.0
        %2075 = vmatpush2.msra.mxu0 0.0
        %2076 = vmatprep.mubr.f32.mxu0 0.0
        %2077 = vmatmul.mubr.f32.gmra.mxu0 %v2010
        %v2078 = vpop.f32.mrf.mxu0
        %v2079 = vadd.f32 0.0, %v2078
        %v2080 = vpop.f32.mrf.mxu0
        %2081 = vdwg.mxu0
        %v2083 = vsel %vm1935, %v1929, 0
        %2085 = vmatprep.subr.mxu0 0.0
        %2086 = vmatpush1.msra.mxu0 0.0
        %2087 = vmatprep.subr.mxu0 0.0
        %2088 = vmatpush1.msra.mxu0 0.0
        %2089 = vmatprep.subr.mxu0 0.0
        %2090 = vmatpush1.msra.mxu0 0.0
        %2091 = vmatprep.subr.mxu0 0.0
        %2092 = vmatpush1.msra.mxu0 0.0
        %2093 = vmatprep.subr.mxu0 0.0
        %2094 = vmatpush1.msra.mxu0 0.0
        %2095 = vmatprep.subr.mxu0 0.0
        %2096 = vmatpush1.msra.mxu0 0.0
        %2097 = vmatprep.subr.mxu0 0.0
        %2098 = vmatpush1.msra.mxu0 0.0
        %2099 = vmatprep.subr.mxu0 0.0
        %2100 = vmatpush1.msra.mxu0 0.0
        %2101 = vmatprep.subr.mxu0 0.0
        %2102 = vmatpush1.msra.mxu0 0.0
        %2103 = vmatprep.subr.mxu0 0.0
        %2104 = vmatpush1.msra.mxu0 0.0
        %2105 = vmatprep.subr.mxu0 0.0
        %2106 = vmatpush1.msra.mxu0 0.0
        %2107 = vmatprep.subr.mxu0 0.0
        %2108 = vmatpush1.msra.mxu0 0.0
        %2109 = vmatprep.subr.mxu0 0.0
        %2110 = vmatpush1.msra.mxu0 0.0
        %2111 = vmatprep.subr.mxu0 0.0
        %2112 = vmatpush1.msra.mxu0 0.0
        %2113 = vmatprep.subr.mxu0 0.0
        %2114 = vmatpush1.msra.mxu0 0.0
        %2115 = vmatprep.subr.mxu0 0.0
        %2116 = vmatpush1.msra.mxu0 %v864
        %2117 = vmatprep.subr.mxu0 0.0
        %2118 = vmatpush2.msra.mxu0 0.0
        %2119 = vmatprep.subr.mxu0 0.0
        %2120 = vmatpush2.msra.mxu0 0.0
        %2121 = vmatprep.subr.mxu0 0.0
        %2122 = vmatpush2.msra.mxu0 0.0
        %2123 = vmatprep.subr.mxu0 0.0
        %2124 = vmatpush2.msra.mxu0 0.0
        %2125 = vmatprep.subr.mxu0 0.0
        %2126 = vmatpush2.msra.mxu0 0.0
        %2127 = vmatprep.subr.mxu0 0.0
        %2128 = vmatpush2.msra.mxu0 0.0
        %2129 = vmatprep.subr.mxu0 0.0
        %2130 = vmatpush2.msra.mxu0 0.0
        %2131 = vmatprep.subr.mxu0 0.0
        %2132 = vmatpush2.msra.mxu0 0.0
        %2133 = vmatprep.subr.mxu0 0.0
        %2134 = vmatpush2.msra.mxu0 0.0
        %2135 = vmatprep.subr.mxu0 0.0
        %2136 = vmatpush2.msra.mxu0 0.0
        %2137 = vmatprep.subr.mxu0 0.0
        %2138 = vmatpush2.msra.mxu0 0.0
        %2139 = vmatprep.subr.mxu0 0.0
        %2140 = vmatpush2.msra.mxu0 0.0
        %2141 = vmatprep.subr.mxu0 0.0
        %2142 = vmatpush2.msra.mxu0 0.0
        %2143 = vmatprep.subr.mxu0 0.0
        %2144 = vmatpush2.msra.mxu0 0.0
        %2145 = vmatprep.subr.mxu0 0.0
        %2146 = vmatpush2.msra.mxu0 0.0
        %2147 = vmatprep.subr.mxu0 0.0
        %2148 = vmatpush2.msra.mxu0 0.0
        %2149 = vmatprep.mubr.f32.mxu0 0.0
        %2150 = vmatmul.mubr.f32.gmra.mxu0 %v2083
        %v2151 = vpop.f32.mrf.mxu0
        %v2152 = vadd.f32 0.0, %v2151
        %v2153 = vpop.f32.mrf.mxu0
        %2154 = vdwg.mxu0
        %v2156 = vsel %vm1935, %v1930, 0
        %2158 = vmatprep.subr.mxu0 0.0
        %2159 = vmatpush1.msra.mxu0 0.0
        %2160 = vmatprep.subr.mxu0 0.0
        %2161 = vmatpush1.msra.mxu0 0.0
        %2162 = vmatprep.subr.mxu0 0.0
        %2163 = vmatpush1.msra.mxu0 0.0
        %2164 = vmatprep.subr.mxu0 0.0
        %2165 = vmatpush1.msra.mxu0 0.0
        %2166 = vmatprep.subr.mxu0 0.0
        %2167 = vmatpush1.msra.mxu0 0.0
        %2168 = vmatprep.subr.mxu0 0.0
        %2169 = vmatpush1.msra.mxu0 0.0
        %2170 = vmatprep.subr.mxu0 0.0
        %2171 = vmatpush1.msra.mxu0 0.0
        %2172 = vmatprep.subr.mxu0 0.0
        %2173 = vmatpush1.msra.mxu0 0.0
        %2174 = vmatprep.subr.mxu0 0.0
        %2175 = vmatpush1.msra.mxu0 0.0
        %2176 = vmatprep.subr.mxu0 0.0
        %2177 = vmatpush1.msra.mxu0 0.0
        %2178 = vmatprep.subr.mxu0 0.0
        %2179 = vmatpush1.msra.mxu0 0.0
        %2180 = vmatprep.subr.mxu0 0.0
        %2181 = vmatpush1.msra.mxu0 0.0
        %2182 = vmatprep.subr.mxu0 0.0
        %2183 = vmatpush1.msra.mxu0 0.0
        %2184 = vmatprep.subr.mxu0 0.0
        %2185 = vmatpush1.msra.mxu0 0.0
        %2186 = vmatprep.subr.mxu0 0.0
        %2187 = vmatpush1.msra.mxu0 0.0
        %2188 = vmatprep.subr.mxu0 0.0
        %2189 = vmatpush1.msra.mxu0 %v869
        %2190 = vmatprep.subr.mxu0 0.0
        %2191 = vmatpush2.msra.mxu0 0.0
        %2192 = vmatprep.subr.mxu0 0.0
        %2193 = vmatpush2.msra.mxu0 0.0
        %2194 = vmatprep.subr.mxu0 0.0
        %2195 = vmatpush2.msra.mxu0 0.0
        %2196 = vmatprep.subr.mxu0 0.0
        %2197 = vmatpush2.msra.mxu0 0.0
        %2198 = vmatprep.subr.mxu0 0.0
        %2199 = vmatpush2.msra.mxu0 0.0
        %2200 = vmatprep.subr.mxu0 0.0
        %2201 = vmatpush2.msra.mxu0 0.0
        %2202 = vmatprep.subr.mxu0 0.0
        %2203 = vmatpush2.msra.mxu0 0.0
        %2204 = vmatprep.subr.mxu0 0.0
        %2205 = vmatpush2.msra.mxu0 0.0
        %2206 = vmatprep.subr.mxu0 0.0
        %2207 = vmatpush2.msra.mxu0 0.0
        %2208 = vmatprep.subr.mxu0 0.0
        %2209 = vmatpush2.msra.mxu0 0.0
        %2210 = vmatprep.subr.mxu0 0.0
        %2211 = vmatpush2.msra.mxu0 0.0
        %2212 = vmatprep.subr.mxu0 0.0
        %2213 = vmatpush2.msra.mxu0 0.0
        %2214 = vmatprep.subr.mxu0 0.0
        %2215 = vmatpush2.msra.mxu0 0.0
        %2216 = vmatprep.subr.mxu0 0.0
        %2217 = vmatpush2.msra.mxu0 0.0
        %2218 = vmatprep.subr.mxu0 0.0
        %2219 = vmatpush2.msra.mxu0 0.0
        %2220 = vmatprep.subr.mxu0 0.0
        %2221 = vmatpush2.msra.mxu0 0.0
        %2222 = vmatprep.mubr.f32.mxu0 0.0
        %2223 = vmatmul.mubr.f32.gmra.mxu0 %v2156
        %v2224 = vpop.f32.mrf.mxu0
        %v2225 = vadd.f32 0.0, %v2224
        %v2226 = vpop.f32.mrf.mxu0
        %2227 = vdwg.mxu0
        %v2229 = vsel %vm1935, %v1931, 0
        %2231 = vmatprep.subr.mxu0 0.0
        %2232 = vmatpush1.msra.mxu0 0.0
        %2233 = vmatprep.subr.mxu0 0.0
        %2234 = vmatpush1.msra.mxu0 0.0
        %2235 = vmatprep.subr.mxu0 0.0
        %2236 = vmatpush1.msra.mxu0 0.0
        %2237 = vmatprep.subr.mxu0 0.0
        %2238 = vmatpush1.msra.mxu0 0.0
        %2239 = vmatprep.subr.mxu0 0.0
        %2240 = vmatpush1.msra.mxu0 0.0
        %2241 = vmatprep.subr.mxu0 0.0
        %2242 = vmatpush1.msra.mxu0 0.0
        %2243 = vmatprep.subr.mxu0 0.0
        %2244 = vmatpush1.msra.mxu0 0.0
        %2245 = vmatprep.subr.mxu0 0.0
        %2246 = vmatpush1.msra.mxu0 0.0
        %2247 = vmatprep.subr.mxu0 0.0
        %2248 = vmatpush1.msra.mxu0 0.0
        %2249 = vmatprep.subr.mxu0 0.0
        %2250 = vmatpush1.msra.mxu0 0.0
        %2251 = vmatprep.subr.mxu0 0.0
        %2252 = vmatpush1.msra.mxu0 0.0
        %2253 = vmatprep.subr.mxu0 0.0
        %2254 = vmatpush1.msra.mxu0 0.0
        %2255 = vmatprep.subr.mxu0 0.0
        %2256 = vmatpush1.msra.mxu0 0.0
        %2257 = vmatprep.subr.mxu0 0.0
        %2258 = vmatpush1.msra.mxu0 0.0
        %2259 = vmatprep.subr.mxu0 0.0
        %2260 = vmatpush1.msra.mxu0 0.0
        %2261 = vmatprep.subr.mxu0 0.0
        %2262 = vmatpush1.msra.mxu0 %v874
        %2263 = vmatprep.subr.mxu0 0.0
        %2264 = vmatpush2.msra.mxu0 0.0
        %2265 = vmatprep.subr.mxu0 0.0
        %2266 = vmatpush2.msra.mxu0 0.0
        %2267 = vmatprep.subr.mxu0 0.0
        %2268 = vmatpush2.msra.mxu0 0.0
        %2269 = vmatprep.subr.mxu0 0.0
        %2270 = vmatpush2.msra.mxu0 0.0
        %2271 = vmatprep.subr.mxu0 0.0
        %2272 = vmatpush2.msra.mxu0 0.0
        %2273 = vmatprep.subr.mxu0 0.0
        %2274 = vmatpush2.msra.mxu0 0.0
        %2275 = vmatprep.subr.mxu0 0.0
        %2276 = vmatpush2.msra.mxu0 0.0
        %2277 = vmatprep.subr.mxu0 0.0
        %2278 = vmatpush2.msra.mxu0 0.0
        %2279 = vmatprep.subr.mxu0 0.0
        %2280 = vmatpush2.msra.mxu0 0.0
        %2281 = vmatprep.subr.mxu0 0.0
        %2282 = vmatpush2.msra.mxu0 0.0
        %2283 = vmatprep.subr.mxu0 0.0
        %2284 = vmatpush2.msra.mxu0 0.0
        %2285 = vmatprep.subr.mxu0 0.0
        %2286 = vmatpush2.msra.mxu0 0.0
        %2287 = vmatprep.subr.mxu0 0.0
        %2288 = vmatpush2.msra.mxu0 0.0
        %2289 = vmatprep.subr.mxu0 0.0
        %2290 = vmatpush2.msra.mxu0 0.0
        %2291 = vmatprep.subr.mxu0 0.0
        %2292 = vmatpush2.msra.mxu0 0.0
        %2293 = vmatprep.subr.mxu0 0.0
        %2294 = vmatpush2.msra.mxu0 0.0
        %2295 = vmatprep.mubr.f32.mxu0 0.0
        %2296 = vmatmul.mubr.f32.gmra.mxu0 %v2229
        %v2297 = vpop.f32.mrf.mxu0
        %v2298 = vadd.f32 0.0, %v2297
        %v2299 = vpop.f32.mrf.mxu0
        %2300 = vdwg.mxu0
        %v2302 = vsel %vm1935, %v1932, 0
        %2304 = vmatprep.subr.mxu0 0.0
        %2305 = vmatpush1.msra.mxu0 0.0
        %2306 = vmatprep.subr.mxu0 0.0
        %2307 = vmatpush1.msra.mxu0 0.0
        %2308 = vmatprep.subr.mxu0 0.0
        %2309 = vmatpush1.msra.mxu0 0.0
        %2310 = vmatprep.subr.mxu0 0.0
        %2311 = vmatpush1.msra.mxu0 0.0
        %2312 = vmatprep.subr.mxu0 0.0
        %2313 = vmatpush1.msra.mxu0 0.0
        %2314 = vmatprep.subr.mxu0 0.0
        %2315 = vmatpush1.msra.mxu0 0.0
        %2316 = vmatprep.subr.mxu0 0.0
        %2317 = vmatpush1.msra.mxu0 0.0
        %2318 = vmatprep.subr.mxu0 0.0
        %2319 = vmatpush1.msra.mxu0 0.0
        %2320 = vmatprep.subr.mxu0 0.0
        %2321 = vmatpush1.msra.mxu0 0.0
        %2322 = vmatprep.subr.mxu0 0.0
        %2323 = vmatpush1.msra.mxu0 0.0
        %2324 = vmatprep.subr.mxu0 0.0
        %2325 = vmatpush1.msra.mxu0 0.0
        %2326 = vmatprep.subr.mxu0 0.0
        %2327 = vmatpush1.msra.mxu0 0.0
        %2328 = vmatprep.subr.mxu0 0.0
        %2329 = vmatpush1.msra.mxu0 0.0
        %2330 = vmatprep.subr.mxu0 0.0
        %2331 = vmatpush1.msra.mxu0 0.0
        %2332 = vmatprep.subr.mxu0 0.0
        %2333 = vmatpush1.msra.mxu0 0.0
        %2334 = vmatprep.subr.mxu0 0.0
        %2335 = vmatpush1.msra.mxu0 %v879
        %2336 = vmatprep.subr.mxu0 0.0
        %2337 = vmatpush2.msra.mxu0 0.0
        %2338 = vmatprep.subr.mxu0 0.0
        %2339 = vmatpush2.msra.mxu0 0.0
        %2340 = vmatprep.subr.mxu0 0.0
        %2341 = vmatpush2.msra.mxu0 0.0
        %2342 = vmatprep.subr.mxu0 0.0
        %2343 = vmatpush2.msra.mxu0 0.0
        %2344 = vmatprep.subr.mxu0 0.0
        %2345 = vmatpush2.msra.mxu0 0.0
        %2346 = vmatprep.subr.mxu0 0.0
        %2347 = vmatpush2.msra.mxu0 0.0
        %2348 = vmatprep.subr.mxu0 0.0
        %2349 = vmatpush2.msra.mxu0 0.0
        %2350 = vmatprep.subr.mxu0 0.0
        %2351 = vmatpush2.msra.mxu0 0.0
        %2352 = vmatprep.subr.mxu0 0.0
        %2353 = vmatpush2.msra.mxu0 0.0
        %2354 = vmatprep.subr.mxu0 0.0
        %2355 = vmatpush2.msra.mxu0 0.0
        %2356 = vmatprep.subr.mxu0 0.0
        %2357 = vmatpush2.msra.mxu0 0.0
        %2358 = vmatprep.subr.mxu0 0.0
        %2359 = vmatpush2.msra.mxu0 0.0
        %2360 = vmatprep.subr.mxu0 0.0
        %2361 = vmatpush2.msra.mxu0 0.0
        %2362 = vmatprep.subr.mxu0 0.0
        %2363 = vmatpush2.msra.mxu0 0.0
        %2364 = vmatprep.subr.mxu0 0.0
        %2365 = vmatpush2.msra.mxu0 0.0
        %2366 = vmatprep.subr.mxu0 0.0
        %2367 = vmatpush2.msra.mxu0 0.0
        %2368 = vmatprep.mubr.f32.mxu0 0.0
        %2369 = vmatmul.mubr.f32.gmra.mxu0 %v2302
        %v2370 = vpop.f32.mrf.mxu0
        %v2371 = vadd.f32 0.0, %v2370
        %v2372 = vpop.f32.mrf.mxu0
        %2373 = vdwg.mxu0
        %v2375 = vsel %vm1935, %v1933, 0
        %2377 = vmatprep.subr.mxu0 0.0
        %2378 = vmatpush1.msra.mxu0 0.0
        %2379 = vmatprep.subr.mxu0 0.0
        %2380 = vmatpush1.msra.mxu0 0.0
        %2381 = vmatprep.subr.mxu0 0.0
        %2382 = vmatpush1.msra.mxu0 0.0
        %2383 = vmatprep.subr.mxu0 0.0
        %2384 = vmatpush1.msra.mxu0 0.0
        %2385 = vmatprep.subr.mxu0 0.0
        %2386 = vmatpush1.msra.mxu0 0.0
        %2387 = vmatprep.subr.mxu0 0.0
        %2388 = vmatpush1.msra.mxu0 0.0
        %2389 = vmatprep.subr.mxu0 0.0
        %2390 = vmatpush1.msra.mxu0 0.0
        %2391 = vmatprep.subr.mxu0 0.0
        %2392 = vmatpush1.msra.mxu0 0.0
        %2393 = vmatprep.subr.mxu0 0.0
        %2394 = vmatpush1.msra.mxu0 0.0
        %2395 = vmatprep.subr.mxu0 0.0
        %2396 = vmatpush1.msra.mxu0 0.0
        %2397 = vmatprep.subr.mxu0 0.0
        %2398 = vmatpush1.msra.mxu0 0.0
        %2399 = vmatprep.subr.mxu0 0.0
        %2400 = vmatpush1.msra.mxu0 0.0
        %2401 = vmatprep.subr.mxu0 0.0
        %2402 = vmatpush1.msra.mxu0 0.0
        %2403 = vmatprep.subr.mxu0 0.0
        %2404 = vmatpush1.msra.mxu0 0.0
        %2405 = vmatprep.subr.mxu0 0.0
        %2406 = vmatpush1.msra.mxu0 0.0
        %2407 = vmatprep.subr.mxu0 0.0
        %2408 = vmatpush1.msra.mxu0 %v884
        %2409 = vmatprep.subr.mxu0 0.0
        %2410 = vmatpush2.msra.mxu0 0.0
        %2411 = vmatprep.subr.mxu0 0.0
        %2412 = vmatpush2.msra.mxu0 0.0
        %2413 = vmatprep.subr.mxu0 0.0
        %2414 = vmatpush2.msra.mxu0 0.0
        %2415 = vmatprep.subr.mxu0 0.0
        %2416 = vmatpush2.msra.mxu0 0.0
        %2417 = vmatprep.subr.mxu0 0.0
        %2418 = vmatpush2.msra.mxu0 0.0
        %2419 = vmatprep.subr.mxu0 0.0
        %2420 = vmatpush2.msra.mxu0 0.0
        %2421 = vmatprep.subr.mxu0 0.0
        %2422 = vmatpush2.msra.mxu0 0.0
        %2423 = vmatprep.subr.mxu0 0.0
        %2424 = vmatpush2.msra.mxu0 0.0
        %2425 = vmatprep.subr.mxu0 0.0
        %2426 = vmatpush2.msra.mxu0 0.0
        %2427 = vmatprep.subr.mxu0 0.0
        %2428 = vmatpush2.msra.mxu0 0.0
        %2429 = vmatprep.subr.mxu0 0.0
        %2430 = vmatpush2.msra.mxu0 0.0
        %2431 = vmatprep.subr.mxu0 0.0
        %2432 = vmatpush2.msra.mxu0 0.0
        %2433 = vmatprep.subr.mxu0 0.0
        %2434 = vmatpush2.msra.mxu0 0.0
        %2435 = vmatprep.subr.mxu0 0.0
        %2436 = vmatpush2.msra.mxu0 0.0
        %2437 = vmatprep.subr.mxu0 0.0
        %2438 = vmatpush2.msra.mxu0 0.0
        %2439 = vmatprep.subr.mxu0 0.0
        %2440 = vmatpush2.msra.mxu0 0.0
        %2441 = vmatprep.mubr.f32.mxu0 0.0
        %2442 = vmatmul.mubr.f32.gmra.mxu0 %v2375
        %v2443 = vpop.f32.mrf.mxu0
        %v2444 = vadd.f32 0.0, %v2443
        %v2445 = vpop.f32.mrf.mxu0
        %2446 = vdwg.mxu0
        %v2448 = vsel %vm1935, %v1934, 0
        %2450 = vmatprep.subr.mxu0 0.0
        %2451 = vmatpush1.msra.mxu0 0.0
        %2452 = vmatprep.subr.mxu0 0.0
        %2453 = vmatpush1.msra.mxu0 0.0
        %2454 = vmatprep.subr.mxu0 0.0
        %2455 = vmatpush1.msra.mxu0 0.0
        %2456 = vmatprep.subr.mxu0 0.0
        %2457 = vmatpush1.msra.mxu0 0.0
        %2458 = vmatprep.subr.mxu0 0.0
        %2459 = vmatpush1.msra.mxu0 0.0
        %2460 = vmatprep.subr.mxu0 0.0
        %2461 = vmatpush1.msra.mxu0 0.0
        %2462 = vmatprep.subr.mxu0 0.0
        %2463 = vmatpush1.msra.mxu0 0.0
        %2464 = vmatprep.subr.mxu0 0.0
        %2465 = vmatpush1.msra.mxu0 0.0
        %2466 = vmatprep.subr.mxu0 0.0
        %2467 = vmatpush1.msra.mxu0 0.0
        %2468 = vmatprep.subr.mxu0 0.0
        %2469 = vmatpush1.msra.mxu0 0.0
        %2470 = vmatprep.subr.mxu0 0.0
        %2471 = vmatpush1.msra.mxu0 0.0
        %2472 = vmatprep.subr.mxu0 0.0
        %2473 = vmatpush1.msra.mxu0 0.0
        %2474 = vmatprep.subr.mxu0 0.0
        %2475 = vmatpush1.msra.mxu0 0.0
        %2476 = vmatprep.subr.mxu0 0.0
        %2477 = vmatpush1.msra.mxu0 0.0
        %2478 = vmatprep.subr.mxu0 0.0
        %2479 = vmatpush1.msra.mxu0 0.0
        %2480 = vmatprep.subr.mxu0 0.0
        %2481 = vmatpush1.msra.mxu0 %v889
        %2482 = vmatprep.subr.mxu0 0.0
        %2483 = vmatpush2.msra.mxu0 0.0
        %2484 = vmatprep.subr.mxu0 0.0
        %2485 = vmatpush2.msra.mxu0 0.0
        %2486 = vmatprep.subr.mxu0 0.0
        %2487 = vmatpush2.msra.mxu0 0.0
        %2488 = vmatprep.subr.mxu0 0.0
        %2489 = vmatpush2.msra.mxu0 0.0
        %2490 = vmatprep.subr.mxu0 0.0
        %2491 = vmatpush2.msra.mxu0 0.0
        %2492 = vmatprep.subr.mxu0 0.0
        %2493 = vmatpush2.msra.mxu0 0.0
        %2494 = vmatprep.subr.mxu0 0.0
        %2495 = vmatpush2.msra.mxu0 0.0
        %2496 = vmatprep.subr.mxu0 0.0
        %2497 = vmatpush2.msra.mxu0 0.0
        %2498 = vmatprep.subr.mxu0 0.0
        %2499 = vmatpush2.msra.mxu0 0.0
        %2500 = vmatprep.subr.mxu0 0.0
        %2501 = vmatpush2.msra.mxu0 0.0
        %2502 = vmatprep.subr.mxu0 0.0
        %2503 = vmatpush2.msra.mxu0 0.0
        %2504 = vmatprep.subr.mxu0 0.0
        %2505 = vmatpush2.msra.mxu0 0.0
        %2506 = vmatprep.subr.mxu0 0.0
        %2507 = vmatpush2.msra.mxu0 0.0
        %2508 = vmatprep.subr.mxu0 0.0
        %2509 = vmatpush2.msra.mxu0 0.0
        %2510 = vmatprep.subr.mxu0 0.0
        %2511 = vmatpush2.msra.mxu0 0.0
        %2512 = vmatprep.subr.mxu0 0.0
        %2513 = vmatpush2.msra.mxu0 0.0
        %2514 = vmatprep.mubr.f32.mxu0 0.0
        %2515 = vmatmul.mubr.f32.gmra.mxu0 %v2448
        %v2516 = vpop.f32.mrf.mxu0
        %v2517 = vadd.f32 0.0, %v2516
        %v2518 = vpop.f32.mrf.mxu0
        %2519 = vdwg.mxu0
        %v2520 = vld [vmem:[#allocation6] sm:$0xff]
        %v2521 = vld [vmem:[#allocation6 + $0x8] sm:$0xff]
        %v2522 = vld [vmem:[#allocation6 + $0x10] sm:$0xff]
        %v2523 = vld [vmem:[#allocation6 + $0x18] sm:$0xff]
        %v2524 = vld [vmem:[%s14] sm:$0x1]
        %v2526 = vlaneseq
        %v2527 = vshrl.u32 %v2526, 7
        %v2528 = vsub.s32 0, %v2527
        %v2529 = vrot.slane %v2524, %v2528
        %v2539 = vrot.slane %v2079, 7
        %vm2540 = vcmask 1041409
        %v2541 = vsel %vm2540, %v2539, %v2006
        %v2542 = vrot.slane %v2152, 6
        %vm2543 = vcmask 1042434
        %v2544 = vsel %vm2543, %v2542, %v2541
        %v2545 = vrot.slane %v2225, 5
        %vm2546 = vcmask 1043459
        %v2547 = vsel %vm2546, %v2545, %v2544
        %v2548 = vrot.slane %v2298, 4
        %vm2549 = vcmask 1044484
        %v2550 = vsel %vm2549, %v2548, %v2547
        %v2551 = vrot.slane %v2371, 3
        %vm2552 = vcmask 1045509
        %v2553 = vsel %vm2552, %v2551, %v2550
        %v2554 = vrot.slane %v2444, 2
        %vm2555 = vcmask 1046534
        %v2556 = vsel %vm2555, %v2554, %v2553
        %v2557 = vrot.slane %v2517, 1
        %vm2558 = vcmask 1047559
        %v2559 = vsel %vm2558, %v2557, %v2556
        %v2560 = vsel %vm762, %v2559, 0
        %2562 = vmatprep.subr.mxu0 0.0
        %2563 = vmatpush1.msra.mxu0 0.0
        %2564 = vmatprep.subr.mxu0 0.0
        %2565 = vmatpush1.msra.mxu0 0.0
        %2566 = vmatprep.subr.mxu0 0.0
        %2567 = vmatpush1.msra.mxu0 0.0
        %2568 = vmatprep.subr.mxu0 0.0
        %2569 = vmatpush1.msra.mxu0 0.0
        %2570 = vmatprep.subr.mxu0 0.0
        %2571 = vmatpush1.msra.mxu0 0.0
        %2572 = vmatprep.subr.mxu0 0.0
        %2573 = vmatpush1.msra.mxu0 0.0
        %2574 = vmatprep.subr.mxu0 0.0
        %2575 = vmatpush1.msra.mxu0 0.0
        %2576 = vmatprep.subr.mxu0 0.0
        %2577 = vmatpush1.msra.mxu0 0.0
        %2578 = vmatprep.subr.mxu0 0.0
        %2579 = vmatpush1.msra.mxu0 0.0
        %2580 = vmatprep.subr.mxu0 0.0
        %2581 = vmatpush1.msra.mxu0 0.0
        %2582 = vmatprep.subr.mxu0 0.0
        %2583 = vmatpush1.msra.mxu0 0.0
        %2584 = vmatprep.subr.mxu0 0.0
        %2585 = vmatpush1.msra.mxu0 0.0
        %2586 = vmatprep.subr.mxu0 0.0
        %2587 = vmatpush1.msra.mxu0 %v2523
        %2588 = vmatprep.subr.mxu0 0.0
        %2589 = vmatpush1.msra.mxu0 %v2522
        %2590 = vmatprep.subr.mxu0 0.0
        %2591 = vmatpush1.msra.mxu0 %v2521
        %2592 = vmatprep.subr.mxu0 0.0
        %2593 = vmatpush1.msra.mxu0 %v2520
        %2594 = vmatprep.subr.mxu0 0.0
        %2595 = vmatpush2.msra.mxu0 0.0
        %2596 = vmatprep.subr.mxu0 0.0
        %2597 = vmatpush2.msra.mxu0 0.0
        %2598 = vmatprep.subr.mxu0 0.0
        %2599 = vmatpush2.msra.mxu0 0.0
        %2600 = vmatprep.subr.mxu0 0.0
        %2601 = vmatpush2.msra.mxu0 0.0
        %2602 = vmatprep.subr.mxu0 0.0
        %2603 = vmatpush2.msra.mxu0 0.0
        %2604 = vmatprep.subr.mxu0 0.0
        %2605 = vmatpush2.msra.mxu0 0.0
        %2606 = vmatprep.subr.mxu0 0.0
        %2607 = vmatpush2.msra.mxu0 0.0
        %2608 = vmatprep.subr.mxu0 0.0
        %2609 = vmatpush2.msra.mxu0 0.0
        %2610 = vmatprep.subr.mxu0 0.0
        %2611 = vmatpush2.msra.mxu0 0.0
        %2612 = vmatprep.subr.mxu0 0.0
        %2613 = vmatpush2.msra.mxu0 0.0
        %2614 = vmatprep.subr.mxu0 0.0
        %2615 = vmatpush2.msra.mxu0 0.0
        %2616 = vmatprep.subr.mxu0 0.0
        %2617 = vmatpush2.msra.mxu0 0.0
        %2618 = vmatprep.subr.mxu0 0.0
        %2619 = vmatpush2.msra.mxu0 0.0
        %2620 = vmatprep.subr.mxu0 0.0
        %2621 = vmatpush2.msra.mxu0 0.0
        %2622 = vmatprep.subr.mxu0 0.0
        %2623 = vmatpush2.msra.mxu0 0.0
        %2624 = vmatprep.subr.mxu0 0.0
        %2625 = vmatpush2.msra.mxu0 0.0
        %2626 = vmatprep.mubr.f32.mxu0 0.0
        %2627 = vmatmul.mubr.f32.gmra.mxu0 %v2560
        %v2628 = vpop.f32.mrf.mxu0
        %v2629 = vadd.f32 %v2529, %v2628
        %v2630 = vpop.f32.mrf.mxu0
        %2631 = vdwg.mxu0
        %v2632 = vmax.f32 %v2629, 0.0
        %2633 = vst.msk [vmem:[%s572] sm:$0xff] %vm762, %v2632
        %s2634 = sand.u32 %s378, 1
        %s2635 = scalar_lea.sflag [#allocation5], %s2634
        %s2636 = sand.u32 %s378, 1
        %s2637 = smul.addr %s2636, 8
        %s2638 = scalar_lea.vmem [#allocation8], %s2637
        // Predicated region
        $region89: #{tpu_custom_call.1} parent=79 // pred_check
          %p2639 = pneg %p388
        $region90: #{tpu_custom_call.1} parent=79 // pred_check_branch
          %2641 = sbr.rel (%p2639) target = $region92
        $region91: #{tpu_custom_call.1} parent=79 // pred_region
          %s2643 = ssub.s32 128, 128
          %2644 = vsyncadd %s2635, %s2643
          %s2645 = smul.addr %s35, 128
          %s2646 = scalar_lea.hbm %s15, %s2645
          %s2648 = sshll.u32 %s2638, 4
          %s2649 = int_to_ptr.vmem [resolvable:$true] %s2648
          %2651 = dma.vmem_to_hbm [thread:$0]  %s2649, 128, %s2646, %s2635
        $region92: #{tpu_custom_call.1} parent=79 // pred_fallthru
          _
      $region80: #{tpu_custom_call.1} parent=5 // pred_fallthru
        _
      %p2652 = scmp.le.s32.totalorder 2, %s30
      // Predicated region
      $region93: #{tpu_custom_call.1} parent=5 // pred_check
        %p2653 = pneg %p2652
      $region94: #{tpu_custom_call.1} parent=5 // pred_check_branch
        %2655 = sbr.rel (%p2653) target = $region96
      $region95: #{tpu_custom_call.1} parent=5 // pred_region
        %s2656 = ssub.s32 %s30, 2
        // Predicated region
        $region97: #{tpu_custom_call.1} parent=95 // pred_check
          %p2657 = pneg %p394
        $region98: #{tpu_custom_call.1} parent=95 // pred_check_branch
          %2659 = sbr.rel (%p2657) target = $region100
        $region99: #{tpu_custom_call.1} parent=95 // pred_region
          %s2660 = sand.u32 %s379, 1
          %s2661 = scalar_lea.sflag [#allocation5], %s2660
          %s2662 = sand.u32 %s379, 1
          %s2663 = smul.addr %s2662, 8
          %s2664 = scalar_lea.vmem [#allocation8], %s2663
          %2665 = dma.done %s2661, 128
        $region100: #{tpu_custom_call.1} parent=95 // pred_fallthru
          _
      $region96: #{tpu_custom_call.1} parent=5 // pred_fallthru
        _
    $region6: #{tpu_custom_call.1} parent=1 // loop_footer
      %s34 = sadd.s32 1, %s30
    $region7: #{tpu_custom_call.1} parent=1 // loop_footer_branch
      %29 = sbr.rel target = $region3
    $region8: #{tpu_custom_call.1} parent=1 // loop_exit
      _
    %2666 = vsyncpa [#allocation4], 1
    %s2667 = scalar_lea.sflag [#allocation4], 1
    %2668 = vsyncpa %s2667, 1
    %2669 = vsyncpa [#allocation7], 1
    %2670 = vsyncpa [#allocation5], 1
    %s2671 = scalar_lea.sflag [#allocation5], 1
    %2672 = vsyncpa %s2671, 1

</llo_original>
